<compile_context>
chip_gen: v7x
topology: tpu7x:2x2x1
jax: 0.10.0
libtpu: 0.0.40
codegen_flags: <defaults>
</compile_context>

<pallas_src>
import functools

import numpy as np
import jax
import jax.numpy as jnp
from jax.experimental import pallas as pl
from jax.experimental.pallas import tpu as pltpu


def _round_up(x, m):
    return (x + m - 1) // m * m


def _pad2d(a, rows, cols):
    r, c = a.shape
    if r == rows and c == cols:
        return a
    return jnp.pad(a, ((0, rows - r), (0, cols - c)))


def _vmem_capacity_bytes():
    try:
        return int(pltpu.get_tpu_info().vmem_capacity_bytes)
    except Exception:
        return 64 << 20          # conservative (v7x-sized) fallback


def _device_kind():
    try:
        return jax.devices()[0].device_kind.lower()
    except Exception:
        return ""


# ---------------------------------------------------------------------------
# Fused path (small graphs): single grid step, adj read from HBM exactly once,
# all three layers computed with exact per-layer padded widths.
# ---------------------------------------------------------------------------
def _fused_encoder_kernel(x_ref, w1_ref, w2_ref, w3_ref, adj_ref, out_ref, *,
                          agg_dtype):
    adj = adj_ref[...]

    def agg(s):
        # adj is stored in agg_dtype; cast support to match so the MXU runs
        # a single-dtype (bf16 or f32) pass with f32 accumulation.
        return jnp.dot(adj, s.astype(agg_dtype),
                       preferred_element_type=jnp.float32)

    s1 = jnp.tanh(jnp.dot(x_ref[...], w1_ref[...],
                          preferred_element_type=jnp.float32))
    z1 = agg(s1)
    s2 = jnp.tanh(jnp.dot(z1, w2_ref[...],
                          preferred_element_type=jnp.float32))
    z2 = agg(s2)
    s3 = jnp.dot(z2, w3_ref[...], preferred_element_type=jnp.float32)
    out_ref[...] = agg(s3).astype(out_ref.dtype)


def fused_encoder(x_pad, w1t, w2t, w3t, adj_pad, *, agg_dtype,
                  vmem_limit_bytes):
    npad = adj_pad.shape[0]
    d_out = w3t.shape[1]
    kernel = functools.partial(_fused_encoder_kernel, agg_dtype=agg_dtype)
    return pl.pallas_call(
        kernel,
        out_shape=jax.ShapeDtypeStruct((npad, d_out), jnp.float32),
        grid_spec=pltpu.PrefetchScalarGridSpec(
            num_scalar_prefetch=0,
            grid=(1,),
            in_specs=[
                pl.BlockSpec(x_pad.shape, lambda i: (0, 0)),
                pl.BlockSpec(w1t.shape, lambda i: (0, 0)),
                pl.BlockSpec(w2t.shape, lambda i: (0, 0)),
                pl.BlockSpec(w3t.shape, lambda i: (0, 0)),
                pl.BlockSpec(adj_pad.shape, lambda i: (0, 0)),
            ],
            out_specs=pl.BlockSpec((npad, d_out), lambda i: (0, 0)),
        ),
        compiler_params=pltpu.CompilerParams(
            dimension_semantics=("arbitrary",),
            vmem_limit_bytes=vmem_limit_bytes,
        ),
    )(x_pad, w1t, w2t, w3t, adj_pad)


# ---------------------------------------------------------------------------
# Tiled path, step 1 (layer 1 only): support = tanh(x @ W1^T), tiled over node
# rows. Weight block has a constant index map -> stays resident in VMEM.
# ---------------------------------------------------------------------------
def _support_kernel(x_ref, wt_ref, out_ref):
    out_ref[...] = jnp.tanh(
        jnp.dot(x_ref[...], wt_ref[...], preferred_element_type=jnp.float32)
    ).astype(out_ref.dtype)


def compute_support(x_pad, wt_pad, *, tm, out_dtype, vmem_limit_bytes):
    npad, din = x_pad.shape
    dout = wt_pad.shape[1]
    return pl.pallas_call(
        _support_kernel,
        out_shape=jax.ShapeDtypeStruct((npad, dout), out_dtype),
        grid_spec=pltpu.PrefetchScalarGridSpec(
            num_scalar_prefetch=0,
            grid=(npad // tm,),
            in_specs=[
                pl.BlockSpec((tm, din), lambda i: (i, 0)),
                pl.BlockSpec((din, dout), lambda i: (0, 0)),   # resident weight
            ],
            out_specs=pl.BlockSpec((tm, dout), lambda i: (i, 0)),
        ),
        compiler_params=pltpu.CompilerParams(
            dimension_semantics=("parallel",),
            vmem_limit_bytes=vmem_limit_bytes,
        ),
    )(x_pad, wt_pad)


# ---------------------------------------------------------------------------
# Tiled path, step 2: out = epilogue(adj @ support), tiled over (rows,
# contraction) with an f32 VMEM accumulator. `support` stays VMEM-resident
# (constant index map) and is sliced in-kernel with pl.ds, so it is read from
# HBM once per layer instead of once per row tile. The next layer's feature
# transform (@ W_next [+ tanh]) is fused into the last-k epilogue.
# ---------------------------------------------------------------------------
def _aggregate_kernel(adj_ref, s_ref, *rest, tk, epilogue, s_resident):
    if epilogue == "none":
        out_ref, acc_ref = rest
        w_ref = None
    else:
        w_ref, out_ref, acc_ref = rest

    k = pl.program_id(1)

    @pl.when(k == 0)
    def _():
        acc_ref[...] = jnp.zeros_like(acc_ref)

    if s_resident:
        off = pl.multiple_of(k * tk, tk)
        s_blk = s_ref[pl.ds(off, tk), :]
    else:
        s_blk = s_ref[...]

    acc_ref[...] += jnp.dot(adj_ref[...], s_blk,
                            preferred_element_type=jnp.float32)

    @pl.when(k == pl.num_programs(1) - 1)
    def _():
        r = acc_ref[...]
        if epilogue != "none":
            r = jnp.dot(r, w_ref[...], preferred_element_type=jnp.float32)
            if epilogue == "tanh":
                r = jnp.tanh(r)
        out_ref[...] = r.astype(out_ref.dtype)


def aggregate(adj_pad, support, w_next, *, epilogue, tm, tk, out_dtype,
              vmem_limit_bytes, support_resident_budget=24 << 20):
    npad = adj_pad.shape[0]
    d_in = support.shape[1]
    d_out = d_in if w_next is None else w_next.shape[1]
    # Keep the whole support matrix resident in VMEM unless it is too large
    # even when double-buffered by the pipeline.
    s_resident = 2 * npad * d_in * support.dtype.itemsize <= support_resident_budget
    kernel = functools.partial(_aggregate_kernel, tk=tk, epilogue=epilogue,
                               s_resident=s_resident)
    if s_resident:
        s_spec = pl.BlockSpec((npad, d_in), lambda i, k: (0, 0))
    else:
        s_spec = pl.BlockSpec((tk, d_in), lambda i, k: (k, 0))
    in_specs = [pl.BlockSpec((tm, tk), lambda i, k: (i, k)), s_spec]
    args = [adj_pad, support]
    if w_next is not None:
        in_specs.append(pl.BlockSpec(w_next.shape, lambda i, k: (0, 0)))
        args.append(w_next)
    return pl.pallas_call(
        kernel,
        out_shape=jax.ShapeDtypeStruct((npad, d_out), out_dtype),
        grid_spec=pltpu.PrefetchScalarGridSpec(
            num_scalar_prefetch=0,
            grid=(npad // tm, npad // tk),
            in_specs=in_specs,
            out_specs=pl.BlockSpec((tm, d_out), lambda i, k: (i, 0)),
            scratch_shapes=[pltpu.VMEM((tm, d_in), jnp.float32)],
        ),
        compiler_params=pltpu.CompilerParams(
            dimension_semantics=("parallel", "arbitrary"),
            vmem_limit_bytes=vmem_limit_bytes,
        ),
    )(*args)


def xavier_uniform(key, out_features, in_features):
    # torch.nn.init.xavier_uniform_ on a (out, in) FloatTensor
    limit = (6.0 / (in_features + out_features)) ** 0.5
    return jax.random.uniform(
        key, (out_features, in_features), jnp.float32, -limit, limit)


class IGAEEncoderPallas:
    """Parameters + forward matching IGAE_encoder(gae_n_enc_1, gae_n_enc_2, hidden_dim, x_dim)."""

    _TILED_N_MULTIPLE = 512

    def __init__(self, key, gae_n_enc_1, gae_n_enc_2, hidden_dim, x_dim,
                 *, agg_dtype=jnp.float32, fused_vmem_budget=None):
        k1, k2, k3 = jax.random.split(key, 3)
        self.dims = (x_dim, gae_n_enc_1, gae_n_enc_2, hidden_dim)
        # Stored like PyTorch: (out_features, in_features), xavier-uniform.
        self.w1 = xavier_uniform(k1, gae_n_enc_1, x_dim)
        self.w2 = xavier_uniform(k2, gae_n_enc_2, gae_n_enc_1)
        self.w3 = xavier_uniform(k3, hidden_dim, gae_n_enc_2)

        # agg_dtype=bf16 is OPT-IN (changes numerics vs the f32 PyTorch ref).
        self.agg_dtype = np.dtype(agg_dtype)

        # Generation-aware VMEM budgets: ~96 MiB limit on 128 MiB chips
        # (v5e/v6e), ~48 MiB on 64 MiB v7x.
        vmem_cap = _vmem_capacity_bytes()
        self._vmem_limit = min(int(vmem_cap * 0.75), 100 << 20)
        if fused_vmem_budget is None:
            fused_vmem_budget = max(self._vmem_limit - (12 << 20), 24 << 20)
        self.fused_vmem_budget = fused_vmem_budget
        # v7x has 2 TensorCores; the fused kernel only uses one, so route
        # medium graphs to the tiled ('parallel' row axis) path there.
        self._prefer_tiled_medium = "v7" in _device_kind()

        # Pre-transpose + zero-pad weights once (feature dims -> multiples of
        # 128: lane-dense stores, full-width MXU columns). Exact per-layer
        # padded widths (no dmax x dmax padding).
        self._dims_pad = tuple(_round_up(d, 128) for d in self.dims)
        weights = (self.w1, self.w2, self.w3)
        self._wt_pad = tuple(
            _pad2d(w.T, din_p, dout_p)
            for w, din_p, dout_p in zip(weights, self._dims_pad[:-1],
                                        self._dims_pad[1:]))

        # Cache of padded / cast adjacency copies: padding + cast are full
        # HBM passes over an npad^2 array and adj is reused every forward.
        self._adj_cache_key = None
        self._adj_cache = {}

    # ---- adjacency preparation (cached) -----------------------------------
    def _prepared_adj(self, adj, kind):
        key = (id(adj), adj.shape)
        if self._adj_cache_key != key:
            self._adj_cache_key = key
            self._adj_cache = {"raw": adj}   # keep a ref so id() stays valid
        cache = self._adj_cache
        if kind not in cache:
            n = adj.shape[0]
            mult = 128 if kind == "fused" else self._TILED_N_MULTIPLE
            npad = _round_up(n, mult)
            # cast BEFORE padding: in bf16 mode the npad^2 f32 intermediate
            # is never materialized.
            cache[kind] = _pad2d(adj.astype(self.agg_dtype), npad, npad)
        return cache[kind]

    def _fused_bytes(self, npad):
        d0p, d1p, d2p, d3p = self._dims_pad
        adj_b = self.agg_dtype.itemsize
        return (2 * npad * npad * adj_b                          # adj (double-buffered)
                + 2 * 4 * npad * (d0p + d3p)                     # x in + out
                + 2 * 4 * (d0p * d1p + d1p * d2p + d2p * d3p)    # weights
                + 2 * 4 * npad * (d1p + d2p + d3p))              # in-kernel intermediates

    # ---- forward -----------------------------------------------------------
    def __call__(self, x, adj, *, force_tiled=False, force_fused=False):
        n, x_dim = x.shape
        assert x_dim == self.dims[0] and adj.shape == (n, n)

        npad_fused = _round_up(n, 128)
        use_fused = (not force_tiled) and (
            force_fused
            or (self._fused_bytes(npad_fused) <= self.fused_vmem_budget
                and not (self._prefer_tiled_medium and npad_fused >= 1024)))

        if use_fused:
            adj_pad = self._prepared_adj(adj, "fused")
            x_pad = _pad2d(x.astype(jnp.float32), npad_fused, self._dims_pad[0])
            out = fused_encoder(x_pad, *self._wt_pad, adj_pad,
                                agg_dtype=self.agg_dtype,
                                vmem_limit_bytes=self._vmem_limit)
            return out[:n, :self.dims[-1]]

        # ---- tiled path (large graphs / medium graphs on v7x) -------------
        adj_pad = self._prepared_adj(adj, "tiled")
        npad = adj_pad.shape[0]
        tm = 512
        tk = next(t for t in (2048, 1024, 512) if npad % t == 0)
        x_pad = _pad2d(x.astype(jnp.float32), npad, self._dims_pad[0])

        w1t, w2t, w3t = self._wt_pad
        vl = self._vmem_limit
        # Layer 1 feature transform (only standalone support kernel); layer 2
        # and 3 transforms are fused into the aggregation epilogues.
        support = compute_support(x_pad, w1t, tm=tm, out_dtype=self.agg_dtype,
                                  vmem_limit_bytes=vl)
        # support2 = tanh((adj @ support1) @ W2^T)
        support = aggregate(adj_pad, support, w2t, epilogue="tanh", tm=tm,
                            tk=tk, out_dtype=self.agg_dtype,
                            vmem_limit_bytes=vl)
        # support3 = (adj @ support2) @ W3^T
        support = aggregate(adj_pad, support, w3t, epilogue="linear", tm=tm,
                            tk=tk, out_dtype=self.agg_dtype,
                            vmem_limit_bytes=vl)
        # z_igae = adj @ support3
        z = aggregate(adj_pad, support, None, epilogue="none", tm=tm, tk=tk,
                      out_dtype=jnp.float32, vmem_limit_bytes=vl)
        return z[:n, :self.dims[-1]]


def reference_forward(model, x, adj):
    hp = jax.lax.Precision.HIGHEST
    z = jnp.dot(adj, jnp.tanh(jnp.dot(x, model.w1.T, precision=hp)), precision=hp)
    z = jnp.dot(adj, jnp.tanh(jnp.dot(z, model.w2.T, precision=hp)), precision=hp)
    return jnp.dot(adj, jnp.dot(z, model.w3.T, precision=hp), precision=hp)


if __name__ == "__main__":
    key = jax.random.PRNGKey(0)
    k_x, k_a, k_m = jax.random.split(key, 3)

    # Small but tiling-relevant shapes: 256 nodes, 100 input features,
    # encoder dims 64 -> 32 -> hidden 16 (padded to 128 lanes internally).
    N, x_dim = 256, 100
    gae_n_enc_1, gae_n_enc_2, hidden_dim = 64, 32, 16

    x = jax.random.normal(k_x, (N, x_dim), jnp.float32)
    # symmetric, row-normalized dense adjacency
    a = jax.random.uniform(k_a, (N, N), jnp.float32)
    adj = (a + a.T) * 0.5
    adj = adj / jnp.sum(adj, axis=1, keepdims=True)

    model = IGAEEncoderPallas(k_m, gae_n_enc_1, gae_n_enc_2, hidden_dim, x_dim)

    z_fused = model(x, adj)                    # small-graph fused (adj-resident) path
    z_tiled = model(x, adj, force_tiled=True)  # large-graph tiled path, same semantics
    jax.block_until_ready((z_fused, z_tiled))

    z_ref = reference_forward(model, x, adj)
    assert z_fused.shape == (N, hidden_dim)
    assert z_tiled.shape == (N, hidden_dim)
    assert jnp.allclose(z_fused, z_ref, atol=1e-5, rtol=1e-3)
    assert jnp.allclose(z_tiled, z_ref, atol=1e-5, rtol=1e-3)

    print("KERNEL_OK")
</pallas_src>

<mosaic_0001>
module attributes {stable_mosaic.version = 11 : i64} {
  func.func @_fused_encoder_kernel(%arg0: i32, %arg1: memref<256x128xf32, #tpu.memory_space<vmem>>, %arg2: memref<128x128xf32, #tpu.memory_space<vmem>>, %arg3: memref<128x128xf32, #tpu.memory_space<vmem>>, %arg4: memref<128x128xf32, #tpu.memory_space<vmem>>, %arg5: memref<256x256xf32, #tpu.memory_space<vmem>>, %arg6: memref<256x128xf32, #tpu.memory_space<vmem>>) attributes {dimension_semantics = [#tpu.dimension_semantics<arbitrary>], iteration_bounds = array<i64: 1>, scalar_prefetch = 0 : i64, scratch_operands = 0 : i64, tpu.core_type = #tpu.core_type<tc>, window_params = [{pipeline_mode = #tpu.pipeline_mode<synchronous>, transform_indices = @transform_0, window_bounds = array<i64: 256, 128>}, {pipeline_mode = #tpu.pipeline_mode<synchronous>, transform_indices = @transform_1, window_bounds = array<i64: 128, 128>}, {pipeline_mode = #tpu.pipeline_mode<synchronous>, transform_indices = @transform_2, window_bounds = array<i64: 128, 128>}, {pipeline_mode = #tpu.pipeline_mode<synchronous>, transform_indices = @transform_3, window_bounds = array<i64: 128, 128>}, {pipeline_mode = #tpu.pipeline_mode<synchronous>, transform_indices = @transform_4, window_bounds = array<i64: 256, 256>}, {pipeline_mode = #tpu.pipeline_mode<synchronous>, transform_indices = @transform_5, window_bounds = array<i64: 256, 128>}]} {
    %c0 = arith.constant 0 : index
    %c0_0 = arith.constant 0 : index
    %0 = vector.load %arg5[%c0, %c0_0] : memref<256x256xf32, #tpu.memory_space<vmem>>, vector<256x256xf32>
    %c0_1 = arith.constant 0 : index
    %c0_2 = arith.constant 0 : index
    %1 = vector.load %arg1[%c0_1, %c0_2] : memref<256x128xf32, #tpu.memory_space<vmem>>, vector<256x128xf32>
    %c0_3 = arith.constant 0 : index
    %c0_4 = arith.constant 0 : index
    %2 = vector.load %arg2[%c0_3, %c0_4] : memref<128x128xf32, #tpu.memory_space<vmem>>, vector<128x128xf32>
    %cst = arith.constant dense<0.000000e+00> : vector<256x128xf32>
    %3 = tpu.matmul %1, %2, %cst {dimension_numbers = #tpu.dot_dimension_numbers<[1], [0], [0], [1], [0, 0, 1, 1], [], []>} : vector<256x128xf32>, vector<128x128xf32>, vector<256x128xf32> -> vector<256x128xf32>
    %4 = math.tanh %3 : vector<256x128xf32>
    %cst_5 = arith.constant dense<0.000000e+00> : vector<256x128xf32>
    %5 = tpu.matmul %0, %4, %cst_5 {dimension_numbers = #tpu.dot_dimension_numbers<[1], [0], [0], [1], [0, 0, 1, 1], [], []>} : vector<256x256xf32>, vector<256x128xf32>, vector<256x128xf32> -> vector<256x128xf32>
    %c0_6 = arith.constant 0 : index
    %c0_7 = arith.constant 0 : index
    %6 = vector.load %arg3[%c0_6, %c0_7] : memref<128x128xf32, #tpu.memory_space<vmem>>, vector<128x128xf32>
    %cst_8 = arith.constant dense<0.000000e+00> : vector<256x128xf32>
    %7 = tpu.matmul %5, %6, %cst_8 {dimension_numbers = #tpu.dot_dimension_numbers<[1], [0], [0], [1], [0, 0, 1, 1], [], []>} : vector<256x128xf32>, vector<128x128xf32>, vector<256x128xf32> -> vector<256x128xf32>
    %8 = math.tanh %7 : vector<256x128xf32>
    %cst_9 = arith.constant dense<0.000000e+00> : vector<256x128xf32>
    %9 = tpu.matmul %0, %8, %cst_9 {dimension_numbers = #tpu.dot_dimension_numbers<[1], [0], [0], [1], [0, 0, 1, 1], [], []>} : vector<256x256xf32>, vector<256x128xf32>, vector<256x128xf32> -> vector<256x128xf32>
    %c0_10 = arith.constant 0 : index
    %c0_11 = arith.constant 0 : index
    %10 = vector.load %arg4[%c0_10, %c0_11] : memref<128x128xf32, #tpu.memory_space<vmem>>, vector<128x128xf32>
    %cst_12 = arith.constant dense<0.000000e+00> : vector<256x128xf32>
    %11 = tpu.matmul %9, %10, %cst_12 {dimension_numbers = #tpu.dot_dimension_numbers<[1], [0], [0], [1], [0, 0, 1, 1], [], []>} : vector<256x128xf32>, vector<128x128xf32>, vector<256x128xf32> -> vector<256x128xf32>
    %cst_13 = arith.constant dense<0.000000e+00> : vector<256x128xf32>
    %12 = tpu.matmul %0, %11, %cst_13 {dimension_numbers = #tpu.dot_dimension_numbers<[1], [0], [0], [1], [0, 0, 1, 1], [], []>} : vector<256x256xf32>, vector<256x128xf32>, vector<256x128xf32> -> vector<256x128xf32>
    %c0_14 = arith.constant 0 : index
    %c0_15 = arith.constant 0 : index
    %13 = vector.load %arg6[%c0_14, %c0_15] : memref<256x128xf32, #tpu.memory_space<vmem>>, vector<256x128xf32>
    tpu.vector_store %arg6[%c0_14, %c0_15], %12 {strides = array<i32>} : memref<256x128xf32, #tpu.memory_space<vmem>>, vector<256x128xf32>,
    return
  }
  func.func @transform_0(%arg0: i32) -> (i32, i32) {
    %c0_i32 = arith.constant 0 : i32
    %c0_i32_0 = arith.constant 0 : i32
    %c0_i32_1 = arith.constant 0 : i32
    return %c0_i32, %c0_i32_0 : i32, i32
  }
  func.func @transform_1(%arg0: i32) -> (i32, i32) {
    %c0_i32 = arith.constant 0 : i32
    %c0_i32_0 = arith.constant 0 : i32
    %c0_i32_1 = arith.constant 0 : i32
    return %c0_i32, %c0_i32_0 : i32, i32
  }
  func.func @transform_2(%arg0: i32) -> (i32, i32) {
    %c0_i32 = arith.constant 0 : i32
    %c0_i32_0 = arith.constant 0 : i32
    %c0_i32_1 = arith.constant 0 : i32
    return %c0_i32, %c0_i32_0 : i32, i32
  }
  func.func @transform_3(%arg0: i32) -> (i32, i32) {
    %c0_i32 = arith.constant 0 : i32
    %c0_i32_0 = arith.constant 0 : i32
    %c0_i32_1 = arith.constant 0 : i32
    return %c0_i32, %c0_i32_0 : i32, i32
  }
  func.func @transform_4(%arg0: i32) -> (i32, i32) {
    %c0_i32 = arith.constant 0 : i32
    %c0_i32_0 = arith.constant 0 : i32
    %c0_i32_1 = arith.constant 0 : i32
    return %c0_i32, %c0_i32_0 : i32, i32
  }
  func.func @transform_5(%arg0: i32) -> (i32, i32) {
    %c0_i32 = arith.constant 0 : i32
    %c0_i32_0 = arith.constant 0 : i32
    %c0_i32_1 = arith.constant 0 : i32
    return %c0_i32, %c0_i32_0 : i32, i32
  }
}

</mosaic_0001>

<llo_original>
// kernel: tpu_custom_call.1
$region0: #{tpu_custom_call.1}
  #allocation0 [shape = 'u32[]', space=smem, size = 0x4, offset = 0x4, fixed_abs, tag = 'smem constant byte address 0x4 - core index']
  #allocation1 [shape = 'u32[144,128]{1,0:T(1,128)}', space=vmem, size = 0x12000, scoped, tag = 'internal scratch']
  %s0 = inlined_call_operand.hbm [shape: f32[256,128], index: 0, kind: input, shape index: {}]
  %s1 = inlined_call_operand.hbm [shape: f32[128,128], index: 1, kind: input, shape index: {}]
  %s2 = inlined_call_operand.hbm [shape: f32[128,128], index: 2, kind: input, shape index: {}]
  %s3 = inlined_call_operand.hbm [shape: f32[128,128], index: 3, kind: input, shape index: {}]
  %s4 = inlined_call_operand.hbm [shape: f32[256,256], index: 4, kind: input, shape index: {}]
  %s5 = inlined_call_operand.hbm [shape: f32[256,128], index: 5, kind: output, shape index: {}]
  %s6 = sld [smem:[#allocation0]]
  $region50: #{tpu_custom_call.1} parent=0
    _
  %s8 = ssub.s32 1, %s6
  %s9 = scalar_select 0, %s8, %s6
  $region1: #{tpu_custom_call.1} parent=0
    #allocation2 [shape = 'u8[131072]{0}', space=vmem, size = 0x20000, scoped, tag = 'input window, operand 0, single buffered']
    #allocation3 [shape = 's32[1]{0}', space=sflag, size = 0x4, scoped, tag = 'scoped memory for tpu_custom_call.1']
    #allocation4 [shape = 's32[1]{0}', space=sflag, size = 0x4, scoped, tag = 'scoped memory for tpu_custom_call.1']
    #allocation5 [shape = 'u8[65536]{0}', space=vmem, size = 0x10000, scoped, tag = 'input window, operand 1, single buffered']
    #allocation6 [shape = 's32[1]{0}', space=sflag, size = 0x4, scoped, tag = 'scoped memory for tpu_custom_call.1']
    #allocation7 [shape = 'u8[65536]{0}', space=vmem, size = 0x10000, scoped, tag = 'input window, operand 2, single buffered']
    #allocation8 [shape = 'u8[65536]{0}', space=vmem, size = 0x10000, scoped, tag = 'input window, operand 3, single buffered']
    #allocation9 [shape = 's32[1]{0}', space=sflag, size = 0x4, scoped, tag = 'scoped memory for tpu_custom_call.1']
    #allocation10 [shape = 'u8[262144]{0}', space=vmem, size = 0x40000, scoped, tag = 'input window, operand 4, single buffered']
    #allocation11 [shape = 'u8[131072]{0}', space=vmem, size = 0x20000, scoped, tag = 'output window, operand 0, single buffered']
    %10 = vsyncpa [#allocation3], 0
    %11 = vsyncpa [#allocation6], 0
    %12 = vsyncpa [#allocation9], 0
    %13 = vsyncpa [#allocation4], 0
    // Predicated region
    $region2: #{tpu_custom_call.1} parent=1 // pred_check
      _
    $region3: #{tpu_custom_call.1} parent=1 // pred_check_branch
      %15 = sbr.rel (0) target = $region5
    $region4: #{tpu_custom_call.1} parent=1 // pred_region
      %s17 = ssub.s32 4096, 4096
      %18 = vsyncadd [#allocation3], %s17
      %s19 = sshll.u32 [#allocation2], 4
      %s20 = int_to_ptr.vmem [resolvable:$true] %s19
      %25 = dma.hbm_to_vmem [thread:$0]  %s0, 4096, %s20, [#allocation3], 128, 128, 8
    $region5: #{tpu_custom_call.1} parent=1 // pred_fallthru
      _
    // Predicated region
    $region6: #{tpu_custom_call.1} parent=1 // pred_check
      _
    $region7: #{tpu_custom_call.1} parent=1 // pred_check_branch
      %27 = sbr.rel (0) target = $region9
    $region8: #{tpu_custom_call.1} parent=1 // pred_region
      %s29 = ssub.s32 2048, 2048
      %30 = vsyncadd [#allocation6], %s29
      %s31 = sshll.u32 [#allocation5], 4
      %s32 = int_to_ptr.vmem [resolvable:$true] %s31
      %37 = dma.hbm_to_vmem [thread:$0]  %s1, 2048, %s32, [#allocation6], 128, 128, 8
    $region9: #{tpu_custom_call.1} parent=1 // pred_fallthru
      _
    // Predicated region
    $region10: #{tpu_custom_call.1} parent=1 // pred_check
      _
    $region11: #{tpu_custom_call.1} parent=1 // pred_check_branch
      %39 = sbr.rel (0) target = $region13
    $region12: #{tpu_custom_call.1} parent=1 // pred_region
      %s41 = ssub.s32 2048, 2048
      %42 = vsyncadd [#allocation6], %s41
      %s43 = sshll.u32 [#allocation7], 4
      %s44 = int_to_ptr.vmem [resolvable:$true] %s43
      %49 = dma.hbm_to_vmem [thread:$0]  %s2, 2048, %s44, [#allocation6], 128, 128, 8
    $region13: #{tpu_custom_call.1} parent=1 // pred_fallthru
      _
    // Predicated region
    $region14: #{tpu_custom_call.1} parent=1 // pred_check
      _
    $region15: #{tpu_custom_call.1} parent=1 // pred_check_branch
      %51 = sbr.rel (0) target = $region17
    $region16: #{tpu_custom_call.1} parent=1 // pred_region
      %s53 = ssub.s32 2048, 2048
      %54 = vsyncadd [#allocation9], %s53
      %s55 = sshll.u32 [#allocation8], 4
      %s56 = int_to_ptr.vmem [resolvable:$true] %s55
      %61 = dma.hbm_to_vmem [thread:$0]  %s3, 2048, %s56, [#allocation9], 128, 128, 8
    $region17: #{tpu_custom_call.1} parent=1 // pred_fallthru
      _
    // Predicated region
    $region18: #{tpu_custom_call.1} parent=1 // pred_check
      _
    $region19: #{tpu_custom_call.1} parent=1 // pred_check_branch
      %63 = sbr.rel (0) target = $region21
    $region20: #{tpu_custom_call.1} parent=1 // pred_region
      %s65 = ssub.s32 8192, 8192
      %66 = vsyncadd [#allocation9], %s65
      %s67 = sshll.u32 [#allocation10], 4
      %s68 = int_to_ptr.vmem [resolvable:$true] %s67
      %73 = dma.hbm_to_vmem [thread:$0]  %s4, 8192, %s68, [#allocation9], 256, 256, 16
    $region21: #{tpu_custom_call.1} parent=1 // pred_fallthru
      _
    // Predicated region
    $region22: #{tpu_custom_call.1} parent=1 // pred_check
      _
    $region23: #{tpu_custom_call.1} parent=1 // pred_check_branch
      %75 = sbr.rel (0) target = $region25
    $region24: #{tpu_custom_call.1} parent=1 // pred_region
      %76 = dma.done [#allocation3], 4096
    $region25: #{tpu_custom_call.1} parent=1 // pred_fallthru
      _
    // Predicated region
    $region26: #{tpu_custom_call.1} parent=1 // pred_check
      _
    $region27: #{tpu_custom_call.1} parent=1 // pred_check_branch
      %78 = sbr.rel (0) target = $region29
    $region28: #{tpu_custom_call.1} parent=1 // pred_region
      %79 = dma.done [#allocation6], 2048
    $region29: #{tpu_custom_call.1} parent=1 // pred_fallthru
      _
    // Predicated region
    $region30: #{tpu_custom_call.1} parent=1 // pred_check
      _
    $region31: #{tpu_custom_call.1} parent=1 // pred_check_branch
      %81 = sbr.rel (0) target = $region33
    $region32: #{tpu_custom_call.1} parent=1 // pred_region
      %82 = dma.done [#allocation6], 2048
    $region33: #{tpu_custom_call.1} parent=1 // pred_fallthru
      _
    // Predicated region
    $region34: #{tpu_custom_call.1} parent=1 // pred_check
      _
    $region35: #{tpu_custom_call.1} parent=1 // pred_check_branch
      %84 = sbr.rel (0) target = $region37
    $region36: #{tpu_custom_call.1} parent=1 // pred_region
      %85 = dma.done [#allocation9], 2048
    $region37: #{tpu_custom_call.1} parent=1 // pred_fallthru
      _
    // Predicated region
    $region38: #{tpu_custom_call.1} parent=1 // pred_check
      _
    $region39: #{tpu_custom_call.1} parent=1 // pred_check_branch
      %87 = sbr.rel (0) target = $region41
    $region40: #{tpu_custom_call.1} parent=1 // pred_region
      %88 = dma.done [#allocation9], 8192
    $region41: #{tpu_custom_call.1} parent=1 // pred_fallthru
      _
    %v89 = vld [vmem:[#allocation10] sm:$0xff]
    %v90 = vld [vmem:[#allocation10 + $0x8] sm:$0xff]
    %v91 = vld [vmem:[#allocation10 + $0x10] sm:$0xff]
    %v92 = vld [vmem:[#allocation10 + $0x18] sm:$0xff]
    %v93 = vld [vmem:[#allocation10 + $0x20] sm:$0xff]
    %v94 = vld [vmem:[#allocation10 + $0x28] sm:$0xff]
    %v95 = vld [vmem:[#allocation10 + $0x30] sm:$0xff]
    %v96 = vld [vmem:[#allocation10 + $0x38] sm:$0xff]
    %v97 = vld [vmem:[#allocation10 + $0x40] sm:$0xff]
    %v98 = vld [vmem:[#allocation10 + $0x48] sm:$0xff]
    %v99 = vld [vmem:[#allocation10 + $0x50] sm:$0xff]
    %v100 = vld [vmem:[#allocation10 + $0x58] sm:$0xff]
    %v101 = vld [vmem:[#allocation10 + $0x60] sm:$0xff]
    %v102 = vld [vmem:[#allocation10 + $0x68] sm:$0xff]
    %v103 = vld [vmem:[#allocation10 + $0x70] sm:$0xff]
    %v104 = vld [vmem:[#allocation10 + $0x78] sm:$0xff]
    %v105 = vld [vmem:[#allocation10 + $0x80] sm:$0xff]
    %v106 = vld [vmem:[#allocation10 + $0x88] sm:$0xff]
    %v107 = vld [vmem:[#allocation10 + $0x90] sm:$0xff]
    %v108 = vld [vmem:[#allocation10 + $0x98] sm:$0xff]
    %v109 = vld [vmem:[#allocation10 + $0xa0] sm:$0xff]
    %v110 = vld [vmem:[#allocation10 + $0xa8] sm:$0xff]
    %v111 = vld [vmem:[#allocation10 + $0xb0] sm:$0xff]
    %v112 = vld [vmem:[#allocation10 + $0xb8] sm:$0xff]
    %v113 = vld [vmem:[#allocation10 + $0xc0] sm:$0xff]
    %v114 = vld [vmem:[#allocation10 + $0xc8] sm:$0xff]
    %v115 = vld [vmem:[#allocation10 + $0xd0] sm:$0xff]
    %v116 = vld [vmem:[#allocation10 + $0xd8] sm:$0xff]
    %v117 = vld [vmem:[#allocation10 + $0xe0] sm:$0xff]
    %v118 = vld [vmem:[#allocation10 + $0xe8] sm:$0xff]
    %v119 = vld [vmem:[#allocation10 + $0xf0] sm:$0xff]
    %v120 = vld [vmem:[#allocation10 + $0xf8] sm:$0xff]
    %v121 = vld [vmem:[#allocation10 + $0x100] sm:$0xff]
    %v122 = vld [vmem:[#allocation10 + $0x108] sm:$0xff]
    %v123 = vld [vmem:[#allocation10 + $0x110] sm:$0xff]
    %v124 = vld [vmem:[#allocation10 + $0x118] sm:$0xff]
    %v125 = vld [vmem:[#allocation10 + $0x120] sm:$0xff]
    %v126 = vld [vmem:[#allocation10 + $0x128] sm:$0xff]
    %v127 = vld [vmem:[#allocation10 + $0x130] sm:$0xff]
    %v128 = vld [vmem:[#allocation10 + $0x138] sm:$0xff]
    %v129 = vld [vmem:[#allocation10 + $0x140] sm:$0xff]
    %v130 = vld [vmem:[#allocation10 + $0x148] sm:$0xff]
    %v131 = vld [vmem:[#allocation10 + $0x150] sm:$0xff]
    %v132 = vld [vmem:[#allocation10 + $0x158] sm:$0xff]
    %v133 = vld [vmem:[#allocation10 + $0x160] sm:$0xff]
    %v134 = vld [vmem:[#allocation10 + $0x168] sm:$0xff]
    %v135 = vld [vmem:[#allocation10 + $0x170] sm:$0xff]
    %v136 = vld [vmem:[#allocation10 + $0x178] sm:$0xff]
    %v137 = vld [vmem:[#allocation10 + $0x180] sm:$0xff]
    %v138 = vld [vmem:[#allocation10 + $0x188] sm:$0xff]
    %v139 = vld [vmem:[#allocation10 + $0x190] sm:$0xff]
    %v140 = vld [vmem:[#allocation10 + $0x198] sm:$0xff]
    %v141 = vld [vmem:[#allocation10 + $0x1a0] sm:$0xff]
    %v142 = vld [vmem:[#allocation10 + $0x1a8] sm:$0xff]
    %v143 = vld [vmem:[#allocation10 + $0x1b0] sm:$0xff]
    %v144 = vld [vmem:[#allocation10 + $0x1b8] sm:$0xff]
    %v145 = vld [vmem:[#allocation10 + $0x1c0] sm:$0xff]
    %v146 = vld [vmem:[#allocation10 + $0x1c8] sm:$0xff]
    %v147 = vld [vmem:[#allocation10 + $0x1d0] sm:$0xff]
    %v148 = vld [vmem:[#allocation10 + $0x1d8] sm:$0xff]
    %v149 = vld [vmem:[#allocation10 + $0x1e0] sm:$0xff]
    %v150 = vld [vmem:[#allocation10 + $0x1e8] sm:$0xff]
    %v151 = vld [vmem:[#allocation10 + $0x1f0] sm:$0xff]
    %v152 = vld [vmem:[#allocation10 + $0x1f8] sm:$0xff]
    %v153 = vld [vmem:[#allocation2] sm:$0xff]
    %v154 = vld [vmem:[#allocation2 + $0x8] sm:$0xff]
    %v155 = vld [vmem:[#allocation2 + $0x10] sm:$0xff]
    %v156 = vld [vmem:[#allocation2 + $0x18] sm:$0xff]
    %v157 = vld [vmem:[#allocation2 + $0x20] sm:$0xff]
    %v158 = vld [vmem:[#allocation2 + $0x28] sm:$0xff]
    %v159 = vld [vmem:[#allocation2 + $0x30] sm:$0xff]
    %v160 = vld [vmem:[#allocation2 + $0x38] sm:$0xff]
    %v161 = vld [vmem:[#allocation2 + $0x40] sm:$0xff]
    %v162 = vld [vmem:[#allocation2 + $0x48] sm:$0xff]
    %v163 = vld [vmem:[#allocation2 + $0x50] sm:$0xff]
    %v164 = vld [vmem:[#allocation2 + $0x58] sm:$0xff]
    %v165 = vld [vmem:[#allocation2 + $0x60] sm:$0xff]
    %v166 = vld [vmem:[#allocation2 + $0x68] sm:$0xff]
    %v167 = vld [vmem:[#allocation2 + $0x70] sm:$0xff]
    %v168 = vld [vmem:[#allocation2 + $0x78] sm:$0xff]
    %v169 = vld [vmem:[#allocation2 + $0x80] sm:$0xff]
    %v170 = vld [vmem:[#allocation2 + $0x88] sm:$0xff]
    %v171 = vld [vmem:[#allocation2 + $0x90] sm:$0xff]
    %v172 = vld [vmem:[#allocation2 + $0x98] sm:$0xff]
    %v173 = vld [vmem:[#allocation2 + $0xa0] sm:$0xff]
    %v174 = vld [vmem:[#allocation2 + $0xa8] sm:$0xff]
    %v175 = vld [vmem:[#allocation2 + $0xb0] sm:$0xff]
    %v176 = vld [vmem:[#allocation2 + $0xb8] sm:$0xff]
    %v177 = vld [vmem:[#allocation2 + $0xc0] sm:$0xff]
    %v178 = vld [vmem:[#allocation2 + $0xc8] sm:$0xff]
    %v179 = vld [vmem:[#allocation2 + $0xd0] sm:$0xff]
    %v180 = vld [vmem:[#allocation2 + $0xd8] sm:$0xff]
    %v181 = vld [vmem:[#allocation2 + $0xe0] sm:$0xff]
    %v182 = vld [vmem:[#allocation2 + $0xe8] sm:$0xff]
    %v183 = vld [vmem:[#allocation2 + $0xf0] sm:$0xff]
    %v184 = vld [vmem:[#allocation2 + $0xf8] sm:$0xff]
    %v185 = vld [vmem:[#allocation5] sm:$0xff]
    %v186 = vld [vmem:[#allocation5 + $0x8] sm:$0xff]
    %v187 = vld [vmem:[#allocation5 + $0x10] sm:$0xff]
    %v188 = vld [vmem:[#allocation5 + $0x18] sm:$0xff]
    %v189 = vld [vmem:[#allocation5 + $0x20] sm:$0xff]
    %v190 = vld [vmem:[#allocation5 + $0x28] sm:$0xff]
    %v191 = vld [vmem:[#allocation5 + $0x30] sm:$0xff]
    %v192 = vld [vmem:[#allocation5 + $0x38] sm:$0xff]
    %v193 = vld [vmem:[#allocation5 + $0x40] sm:$0xff]
    %v194 = vld [vmem:[#allocation5 + $0x48] sm:$0xff]
    %v195 = vld [vmem:[#allocation5 + $0x50] sm:$0xff]
    %v196 = vld [vmem:[#allocation5 + $0x58] sm:$0xff]
    %v197 = vld [vmem:[#allocation5 + $0x60] sm:$0xff]
    %v198 = vld [vmem:[#allocation5 + $0x68] sm:$0xff]
    %v199 = vld [vmem:[#allocation5 + $0x70] sm:$0xff]
    %v200 = vld [vmem:[#allocation5 + $0x78] sm:$0xff]
    %201 = vmatprep.subr.mxu0 0.0
    %202 = vmatpush1.msra.mxu0 %v185
    %203 = vmatprep.subr.mxu0 0.0
    %204 = vmatpush1.msra.mxu0 %v186
    %205 = vmatprep.subr.mxu0 0.0
    %206 = vmatpush1.msra.mxu0 %v187
    %207 = vmatprep.subr.mxu0 0.0
    %208 = vmatpush1.msra.mxu0 %v188
    %209 = vmatprep.subr.mxu0 0.0
    %210 = vmatpush1.msra.mxu0 %v189
    %211 = vmatprep.subr.mxu0 0.0
    %212 = vmatpush1.msra.mxu0 %v190
    %213 = vmatprep.subr.mxu0 0.0
    %214 = vmatpush1.msra.mxu0 %v191
    %215 = vmatprep.subr.mxu0 0.0
    %216 = vmatpush1.msra.mxu0 %v192
    %217 = vmatprep.subr.mxu0 0.0
    %218 = vmatpush1.msra.mxu0 %v193
    %219 = vmatprep.subr.mxu0 0.0
    %220 = vmatpush1.msra.mxu0 %v194
    %221 = vmatprep.subr.mxu0 0.0
    %222 = vmatpush1.msra.mxu0 %v195
    %223 = vmatprep.subr.mxu0 0.0
    %224 = vmatpush1.msra.mxu0 %v196
    %225 = vmatprep.subr.mxu0 0.0
    %226 = vmatpush1.msra.mxu0 %v197
    %227 = vmatprep.subr.mxu0 0.0
    %228 = vmatpush1.msra.mxu0 %v198
    %229 = vmatprep.subr.mxu0 0.0
    %230 = vmatpush1.msra.mxu0 %v199
    %231 = vmatprep.subr.mxu0 0.0
    %232 = vmatpush1.msra.mxu0 %v200
    %233 = vmatprep.subr.mxu0 0.0
    %234 = vmatpush1.msra.mxu0 0.0
    %235 = vmatprep.subr.mxu0 0.0
    %236 = vmatpush1.msra.mxu0 0.0
    %237 = vmatprep.subr.mxu0 0.0
    %238 = vmatpush1.msra.mxu0 0.0
    %239 = vmatprep.subr.mxu0 0.0
    %240 = vmatpush1.msra.mxu0 0.0
    %241 = vmatprep.subr.mxu0 0.0
    %242 = vmatpush1.msra.mxu0 0.0
    %243 = vmatprep.subr.mxu0 0.0
    %244 = vmatpush1.msra.mxu0 0.0
    %245 = vmatprep.subr.mxu0 0.0
    %246 = vmatpush1.msra.mxu0 0.0
    %247 = vmatprep.subr.mxu0 0.0
    %248 = vmatpush1.msra.mxu0 0.0
    %249 = vmatprep.subr.mxu0 0.0
    %250 = vmatpush1.msra.mxu0 0.0
    %251 = vmatprep.subr.mxu0 0.0
    %252 = vmatpush1.msra.mxu0 0.0
    %253 = vmatprep.subr.mxu0 0.0
    %254 = vmatpush1.msra.mxu0 0.0
    %255 = vmatprep.subr.mxu0 0.0
    %256 = vmatpush1.msra.mxu0 0.0
    %257 = vmatprep.subr.mxu0 0.0
    %258 = vmatpush1.msra.mxu0 0.0
    %259 = vmatprep.subr.mxu0 0.0
    %260 = vmatpush1.msra.mxu0 0.0
    %261 = vmatprep.subr.mxu0 0.0
    %262 = vmatpush1.msra.mxu0 0.0
    %263 = vmatprep.subr.mxu0 0.0
    %264 = vmatpush1.msra.mxu0 0.0
    %265 = vmatprep.mubr.f32.mxu0 0.0
    %266 = vmatmul.mubr.f32.gmra.mrb[0].mxu0 %v153
    %v267 = vpop.f32.mrb[0].mxu0
    %v268 = vadd.f32 0.0, %v267
    %v269 = vpop.f32.mrb[0].mxu0
    %270 = vmatprep.mubr.f32.mxu0 0.0
    %271 = vmatmul.mubr.f32.gmra.mrb[0].mxu0 %v154
    %v272 = vpop.f32.mrb[0].mxu0
    %v273 = vadd.f32 0.0, %v272
    %v274 = vpop.f32.mrb[0].mxu0
    %275 = vmatprep.mubr.f32.mxu0 0.0
    %276 = vmatmul.mubr.f32.gmra.mrb[0].mxu0 %v155
    %v277 = vpop.f32.mrb[0].mxu0
    %v278 = vadd.f32 0.0, %v277
    %v279 = vpop.f32.mrb[0].mxu0
    %280 = vmatprep.mubr.f32.mxu0 0.0
    %281 = vmatmul.mubr.f32.gmra.mrb[0].mxu0 %v156
    %v282 = vpop.f32.mrb[0].mxu0
    %v283 = vadd.f32 0.0, %v282
    %v284 = vpop.f32.mrb[0].mxu0
    %285 = vmatprep.mubr.f32.mxu0 0.0
    %286 = vmatmul.mubr.f32.gmra.mrb[0].mxu0 %v157
    %v287 = vpop.f32.mrb[0].mxu0
    %v288 = vadd.f32 0.0, %v287
    %v289 = vpop.f32.mrb[0].mxu0
    %290 = vmatprep.mubr.f32.mxu0 0.0
    %291 = vmatmul.mubr.f32.gmra.mrb[0].mxu0 %v158
    %v292 = vpop.f32.mrb[0].mxu0
    %v293 = vadd.f32 0.0, %v292
    %v294 = vpop.f32.mrb[0].mxu0
    %295 = vmatprep.mubr.f32.mxu0 0.0
    %296 = vmatmul.mubr.f32.gmra.mrb[0].mxu0 %v159
    %v297 = vpop.f32.mrb[0].mxu0
    %v298 = vadd.f32 0.0, %v297
    %v299 = vpop.f32.mrb[0].mxu0
    %300 = vmatprep.mubr.f32.mxu0 0.0
    %301 = vmatmul.mubr.f32.gmra.mrb[0].mxu0 %v160
    %v302 = vpop.f32.mrb[0].mxu0
    %v303 = vadd.f32 0.0, %v302
    %v304 = vpop.f32.mrb[0].mxu0
    %305 = vmatprep.mubr.f32.mxu0 0.0
    %306 = vmatmul.mubr.f32.gmra.mrb[0].mxu0 %v161
    %v307 = vpop.f32.mrb[0].mxu0
    %v308 = vadd.f32 0.0, %v307
    %v309 = vpop.f32.mrb[0].mxu0
    %310 = vmatprep.mubr.f32.mxu0 0.0
    %311 = vmatmul.mubr.f32.gmra.mrb[0].mxu0 %v162
    %v312 = vpop.f32.mrb[0].mxu0
    %v313 = vadd.f32 0.0, %v312
    %v314 = vpop.f32.mrb[0].mxu0
    %315 = vmatprep.mubr.f32.mxu0 0.0
    %316 = vmatmul.mubr.f32.gmra.mrb[0].mxu0 %v163
    %v317 = vpop.f32.mrb[0].mxu0
    %v318 = vadd.f32 0.0, %v317
    %v319 = vpop.f32.mrb[0].mxu0
    %320 = vmatprep.mubr.f32.mxu0 0.0
    %321 = vmatmul.mubr.f32.gmra.mrb[0].mxu0 %v164
    %v322 = vpop.f32.mrb[0].mxu0
    %v323 = vadd.f32 0.0, %v322
    %v324 = vpop.f32.mrb[0].mxu0
    %325 = vmatprep.mubr.f32.mxu0 0.0
    %326 = vmatmul.mubr.f32.gmra.mrb[0].mxu0 %v165
    %v327 = vpop.f32.mrb[0].mxu0
    %v328 = vadd.f32 0.0, %v327
    %v329 = vpop.f32.mrb[0].mxu0
    %330 = vmatprep.mubr.f32.mxu0 0.0
    %331 = vmatmul.mubr.f32.gmra.mrb[0].mxu0 %v166
    %v332 = vpop.f32.mrb[0].mxu0
    %v333 = vadd.f32 0.0, %v332
    %v334 = vpop.f32.mrb[0].mxu0
    %335 = vmatprep.mubr.f32.mxu0 0.0
    %336 = vmatmul.mubr.f32.gmra.mrb[0].mxu0 %v167
    %v337 = vpop.f32.mrb[0].mxu0
    %v338 = vadd.f32 0.0, %v337
    %v339 = vpop.f32.mrb[0].mxu0
    %340 = vmatprep.mubr.f32.mxu0 0.0
    %341 = vmatmul.mubr.f32.gmra.mrb[0].mxu0 %v168
    %v342 = vpop.f32.mrb[0].mxu0
    %v343 = vadd.f32 0.0, %v342
    %v344 = vpop.f32.mrb[0].mxu0
    %345 = vmatprep.mubr.f32.mxu0 0.0
    %346 = vmatmul.mubr.f32.gmra.mrb[0].mxu0 %v169
    %v347 = vpop.f32.mrb[0].mxu0
    %v348 = vadd.f32 0.0, %v347
    %v349 = vpop.f32.mrb[0].mxu0
    %350 = vmatprep.mubr.f32.mxu0 0.0
    %351 = vmatmul.mubr.f32.gmra.mrb[0].mxu0 %v170
    %v352 = vpop.f32.mrb[0].mxu0
    %v353 = vadd.f32 0.0, %v352
    %v354 = vpop.f32.mrb[0].mxu0
    %355 = vmatprep.mubr.f32.mxu0 0.0
    %356 = vmatmul.mubr.f32.gmra.mrb[0].mxu0 %v171
    %v357 = vpop.f32.mrb[0].mxu0
    %v358 = vadd.f32 0.0, %v357
    %v359 = vpop.f32.mrb[0].mxu0
    %360 = vmatprep.mubr.f32.mxu0 0.0
    %361 = vmatmul.mubr.f32.gmra.mrb[0].mxu0 %v172
    %v362 = vpop.f32.mrb[0].mxu0
    %v363 = vadd.f32 0.0, %v362
    %v364 = vpop.f32.mrb[0].mxu0
    %365 = vmatprep.mubr.f32.mxu0 0.0
    %366 = vmatmul.mubr.f32.gmra.mrb[0].mxu0 %v173
    %v367 = vpop.f32.mrb[0].mxu0
    %v368 = vadd.f32 0.0, %v367
    %v369 = vpop.f32.mrb[0].mxu0
    %370 = vmatprep.mubr.f32.mxu0 0.0
    %371 = vmatmul.mubr.f32.gmra.mrb[0].mxu0 %v174
    %v372 = vpop.f32.mrb[0].mxu0
    %v373 = vadd.f32 0.0, %v372
    %v374 = vpop.f32.mrb[0].mxu0
    %375 = vmatprep.mubr.f32.mxu0 0.0
    %376 = vmatmul.mubr.f32.gmra.mrb[0].mxu0 %v175
    %v377 = vpop.f32.mrb[0].mxu0
    %v378 = vadd.f32 0.0, %v377
    %v379 = vpop.f32.mrb[0].mxu0
    %380 = vmatprep.mubr.f32.mxu0 0.0
    %381 = vmatmul.mubr.f32.gmra.mrb[0].mxu0 %v176
    %v382 = vpop.f32.mrb[0].mxu0
    %v383 = vadd.f32 0.0, %v382
    %v384 = vpop.f32.mrb[0].mxu0
    %385 = vmatprep.mubr.f32.mxu0 0.0
    %386 = vmatmul.mubr.f32.gmra.mrb[0].mxu0 %v177
    %v387 = vpop.f32.mrb[0].mxu0
    %v388 = vadd.f32 0.0, %v387
    %v389 = vpop.f32.mrb[0].mxu0
    %390 = vmatprep.mubr.f32.mxu0 0.0
    %391 = vmatmul.mubr.f32.gmra.mrb[0].mxu0 %v178
    %v392 = vpop.f32.mrb[0].mxu0
    %v393 = vadd.f32 0.0, %v392
    %v394 = vpop.f32.mrb[0].mxu0
    %395 = vmatprep.mubr.f32.mxu0 0.0
    %396 = vmatmul.mubr.f32.gmra.mrb[0].mxu0 %v179
    %v397 = vpop.f32.mrb[0].mxu0
    %v398 = vadd.f32 0.0, %v397
    %v399 = vpop.f32.mrb[0].mxu0
    %400 = vmatprep.mubr.f32.mxu0 0.0
    %401 = vmatmul.mubr.f32.gmra.mrb[0].mxu0 %v180
    %v402 = vpop.f32.mrb[0].mxu0
    %v403 = vadd.f32 0.0, %v402
    %v404 = vpop.f32.mrb[0].mxu0
    %405 = vmatprep.mubr.f32.mxu0 0.0
    %406 = vmatmul.mubr.f32.gmra.mrb[0].mxu0 %v181
    %v407 = vpop.f32.mrb[0].mxu0
    %v408 = vadd.f32 0.0, %v407
    %v409 = vpop.f32.mrb[0].mxu0
    %410 = vmatprep.mubr.f32.mxu0 0.0
    %411 = vmatmul.mubr.f32.gmra.mrb[0].mxu0 %v182
    %v412 = vpop.f32.mrb[0].mxu0
    %v413 = vadd.f32 0.0, %v412
    %v414 = vpop.f32.mrb[0].mxu0
    %415 = vmatprep.mubr.f32.mxu0 0.0
    %416 = vmatmul.mubr.f32.gmra.mrb[0].mxu0 %v183
    %v417 = vpop.f32.mrb[0].mxu0
    %v418 = vadd.f32 0.0, %v417
    %v419 = vpop.f32.mrb[0].mxu0
    %420 = vmatprep.mubr.f32.mxu0 0.0
    %421 = vmatmul.mubr.f32.gmra.mrb[0].mxu0 %v184
    %v422 = vpop.f32.mrb[0].mxu0
    %v423 = vadd.f32 0.0, %v422
    %v424 = vpop.f32.mrb[0].mxu0
    %425 = vdwg.mxu0
    %v426 = vtanh.pop %v268
    %v427 = vtanh.pop %v273
    %v428 = vtanh.pop %v278
    %v429 = vtanh.pop %v283
    %v430 = vtanh.pop %v288
    %v431 = vtanh.pop %v293
    %v432 = vtanh.pop %v298
    %v433 = vtanh.pop %v303
    %v434 = vtanh.pop %v308
    %v435 = vtanh.pop %v313
    %v436 = vtanh.pop %v318
    %v437 = vtanh.pop %v323
    %v438 = vtanh.pop %v328
    %v439 = vtanh.pop %v333
    %v440 = vtanh.pop %v338
    %v441 = vtanh.pop %v343
    %v442 = vtanh.pop %v348
    %v443 = vtanh.pop %v353
    %v444 = vtanh.pop %v358
    %v445 = vtanh.pop %v363
    %v446 = vtanh.pop %v368
    %v447 = vtanh.pop %v373
    %v448 = vtanh.pop %v378
    %v449 = vtanh.pop %v383
    %v450 = vtanh.pop %v388
    %v451 = vtanh.pop %v393
    %v452 = vtanh.pop %v398
    %v453 = vtanh.pop %v403
    %v454 = vtanh.pop %v408
    %v455 = vtanh.pop %v413
    %v456 = vtanh.pop %v418
    %v457 = vtanh.pop %v423
    %458 = vmatprep.subr.mxu0 0.0
    %459 = vmatpush1.msra.mxu0 %v426
    %460 = vmatprep.subr.mxu0 0.0
    %461 = vmatpush1.msra.mxu0 %v427
    %462 = vmatprep.subr.mxu0 0.0
    %463 = vmatpush1.msra.mxu0 %v428
    %464 = vmatprep.subr.mxu0 0.0
    %465 = vmatpush1.msra.mxu0 %v429
    %466 = vmatprep.subr.mxu0 0.0
    %467 = vmatpush1.msra.mxu0 %v430
    %468 = vmatprep.subr.mxu0 0.0
    %469 = vmatpush1.msra.mxu0 %v431
    %470 = vmatprep.subr.mxu0 0.0
    %471 = vmatpush1.msra.mxu0 %v432
    %472 = vmatprep.subr.mxu0 0.0
    %473 = vmatpush1.msra.mxu0 %v433
    %474 = vmatprep.subr.mxu0 0.0
    %475 = vmatpush1.msra.mxu0 %v434
    %476 = vmatprep.subr.mxu0 0.0
    %477 = vmatpush1.msra.mxu0 %v435
    %478 = vmatprep.subr.mxu0 0.0
    %479 = vmatpush1.msra.mxu0 %v436
    %480 = vmatprep.subr.mxu0 0.0
    %481 = vmatpush1.msra.mxu0 %v437
    %482 = vmatprep.subr.mxu0 0.0
    %483 = vmatpush1.msra.mxu0 %v438
    %484 = vmatprep.subr.mxu0 0.0
    %485 = vmatpush1.msra.mxu0 %v439
    %486 = vmatprep.subr.mxu0 0.0
    %487 = vmatpush1.msra.mxu0 %v440
    %488 = vmatprep.subr.mxu0 0.0
    %489 = vmatpush1.msra.mxu0 %v441
    %490 = vmatprep.subr.mxu0 0.0
    %491 = vmatpush1.msra.mxu0 %v442
    %492 = vmatprep.subr.mxu0 0.0
    %493 = vmatpush1.msra.mxu0 %v443
    %494 = vmatprep.subr.mxu0 0.0
    %495 = vmatpush1.msra.mxu0 %v444
    %496 = vmatprep.subr.mxu0 0.0
    %497 = vmatpush1.msra.mxu0 %v445
    %498 = vmatprep.subr.mxu0 0.0
    %499 = vmatpush1.msra.mxu0 %v446
    %500 = vmatprep.subr.mxu0 0.0
    %501 = vmatpush1.msra.mxu0 %v447
    %502 = vmatprep.subr.mxu0 0.0
    %503 = vmatpush1.msra.mxu0 %v448
    %504 = vmatprep.subr.mxu0 0.0
    %505 = vmatpush1.msra.mxu0 %v449
    %506 = vmatprep.subr.mxu0 0.0
    %507 = vmatpush1.msra.mxu0 %v450
    %508 = vmatprep.subr.mxu0 0.0
    %509 = vmatpush1.msra.mxu0 %v451
    %510 = vmatprep.subr.mxu0 0.0
    %511 = vmatpush1.msra.mxu0 %v452
    %512 = vmatprep.subr.mxu0 0.0
    %513 = vmatpush1.msra.mxu0 %v453
    %514 = vmatprep.subr.mxu0 0.0
    %515 = vmatpush1.msra.mxu0 %v454
    %516 = vmatprep.subr.mxu0 0.0
    %517 = vmatpush1.msra.mxu0 %v455
    %518 = vmatprep.subr.mxu0 0.0
    %519 = vmatpush1.msra.mxu0 %v456
    %520 = vmatprep.subr.mxu0 0.0
    %521 = vmatpush1.msra.mxu0 %v457
    %522 = vmatprep.mubr.f32.mxu0 %v90
    %523 = vmatmul.mubr.f32.gmra.mrb[0].mxu0 %v89
    %v524 = vpop.f32.mrb[0].mxu0
    %v525 = vadd.f32 0.0, %v524
    %v526 = vpop.f32.mrb[0].mxu0
    %527 = vmatprep.mubr.f32.mxu0 %v92
    %528 = vmatmul.mubr.f32.gmra.mrb[0].mxu0 %v91
    %v529 = vpop.f32.mrb[0].mxu0
    %v530 = vadd.f32 0.0, %v529
    %v531 = vpop.f32.mrb[0].mxu0
    %532 = vmatprep.mubr.f32.mxu0 %v94
    %533 = vmatmul.mubr.f32.gmra.mrb[0].mxu0 %v93
    %v534 = vpop.f32.mrb[0].mxu0
    %v535 = vadd.f32 0.0, %v534
    %v536 = vpop.f32.mrb[0].mxu0
    %537 = vmatprep.mubr.f32.mxu0 %v96
    %538 = vmatmul.mubr.f32.gmra.mrb[0].mxu0 %v95
    %v539 = vpop.f32.mrb[0].mxu0
    %v540 = vadd.f32 0.0, %v539
    %v541 = vpop.f32.mrb[0].mxu0
    %542 = vmatprep.mubr.f32.mxu0 %v98
    %543 = vmatmul.mubr.f32.gmra.mrb[0].mxu0 %v97
    %v544 = vpop.f32.mrb[0].mxu0
    %v545 = vadd.f32 0.0, %v544
    %v546 = vpop.f32.mrb[0].mxu0
    %547 = vmatprep.mubr.f32.mxu0 %v100
    %548 = vmatmul.mubr.f32.gmra.mrb[0].mxu0 %v99
    %v549 = vpop.f32.mrb[0].mxu0
    %v550 = vadd.f32 0.0, %v549
    %v551 = vpop.f32.mrb[0].mxu0
    %552 = vmatprep.mubr.f32.mxu0 %v102
    %553 = vmatmul.mubr.f32.gmra.mrb[0].mxu0 %v101
    %v554 = vpop.f32.mrb[0].mxu0
    %v555 = vadd.f32 0.0, %v554
    %v556 = vpop.f32.mrb[0].mxu0
    %557 = vmatprep.mubr.f32.mxu0 %v104
    %558 = vmatmul.mubr.f32.gmra.mrb[0].mxu0 %v103
    %v559 = vpop.f32.mrb[0].mxu0
    %v560 = vadd.f32 0.0, %v559
    %v561 = vpop.f32.mrb[0].mxu0
    %562 = vmatprep.mubr.f32.mxu0 %v106
    %563 = vmatmul.mubr.f32.gmra.mrb[0].mxu0 %v105
    %v564 = vpop.f32.mrb[0].mxu0
    %v565 = vadd.f32 0.0, %v564
    %v566 = vpop.f32.mrb[0].mxu0
    %567 = vmatprep.mubr.f32.mxu0 %v108
    %568 = vmatmul.mubr.f32.gmra.mrb[0].mxu0 %v107
    %v569 = vpop.f32.mrb[0].mxu0
    %v570 = vadd.f32 0.0, %v569
    %v571 = vpop.f32.mrb[0].mxu0
    %572 = vmatprep.mubr.f32.mxu0 %v110
    %573 = vmatmul.mubr.f32.gmra.mrb[0].mxu0 %v109
    %v574 = vpop.f32.mrb[0].mxu0
    %v575 = vadd.f32 0.0, %v574
    %v576 = vpop.f32.mrb[0].mxu0
    %577 = vmatprep.mubr.f32.mxu0 %v112
    %578 = vmatmul.mubr.f32.gmra.mrb[0].mxu0 %v111
    %v579 = vpop.f32.mrb[0].mxu0
    %v580 = vadd.f32 0.0, %v579
    %v581 = vpop.f32.mrb[0].mxu0
    %582 = vmatprep.mubr.f32.mxu0 %v114
    %583 = vmatmul.mubr.f32.gmra.mrb[0].mxu0 %v113
    %v584 = vpop.f32.mrb[0].mxu0
    %v585 = vadd.f32 0.0, %v584
    %v586 = vpop.f32.mrb[0].mxu0
    %587 = vmatprep.mubr.f32.mxu0 %v116
    %588 = vmatmul.mubr.f32.gmra.mrb[0].mxu0 %v115
    %v589 = vpop.f32.mrb[0].mxu0
    %v590 = vadd.f32 0.0, %v589
    %v591 = vpop.f32.mrb[0].mxu0
    %592 = vmatprep.mubr.f32.mxu0 %v118
    %593 = vmatmul.mubr.f32.gmra.mrb[0].mxu0 %v117
    %v594 = vpop.f32.mrb[0].mxu0
    %v595 = vadd.f32 0.0, %v594
    %v596 = vpop.f32.mrb[0].mxu0
    %597 = vmatprep.mubr.f32.mxu0 %v120
    %598 = vmatmul.mubr.f32.gmra.mrb[0].mxu0 %v119
    %v599 = vpop.f32.mrb[0].mxu0
    %v600 = vadd.f32 0.0, %v599
    %v601 = vpop.f32.mrb[0].mxu0
    %602 = vmatprep.mubr.f32.mxu0 %v122
    %603 = vmatmul.mubr.f32.gmra.mrb[0].mxu0 %v121
    %v604 = vpop.f32.mrb[0].mxu0
    %v605 = vadd.f32 0.0, %v604
    %v606 = vpop.f32.mrb[0].mxu0
    %607 = vmatprep.mubr.f32.mxu0 %v124
    %608 = vmatmul.mubr.f32.gmra.mrb[0].mxu0 %v123
    %v609 = vpop.f32.mrb[0].mxu0
    %v610 = vadd.f32 0.0, %v609
    %v611 = vpop.f32.mrb[0].mxu0
    %612 = vmatprep.mubr.f32.mxu0 %v126
    %613 = vmatmul.mubr.f32.gmra.mrb[0].mxu0 %v125
    %v614 = vpop.f32.mrb[0].mxu0
    %v615 = vadd.f32 0.0, %v614
    %v616 = vpop.f32.mrb[0].mxu0
    %617 = vmatprep.mubr.f32.mxu0 %v128
    %618 = vmatmul.mubr.f32.gmra.mrb[0].mxu0 %v127
    %v619 = vpop.f32.mrb[0].mxu0
    %v620 = vadd.f32 0.0, %v619
    %v621 = vpop.f32.mrb[0].mxu0
    %622 = vmatprep.mubr.f32.mxu0 %v130
    %623 = vmatmul.mubr.f32.gmra.mrb[0].mxu0 %v129
    %v624 = vpop.f32.mrb[0].mxu0
    %v625 = vadd.f32 0.0, %v624
    %v626 = vpop.f32.mrb[0].mxu0
    %627 = vmatprep.mubr.f32.mxu0 %v132
    %628 = vmatmul.mubr.f32.gmra.mrb[0].mxu0 %v131
    %v629 = vpop.f32.mrb[0].mxu0
    %v630 = vadd.f32 0.0, %v629
    %v631 = vpop.f32.mrb[0].mxu0
    %632 = vmatprep.mubr.f32.mxu0 %v134
    %633 = vmatmul.mubr.f32.gmra.mrb[0].mxu0 %v133
    %v634 = vpop.f32.mrb[0].mxu0
    %v635 = vadd.f32 0.0, %v634
    %v636 = vpop.f32.mrb[0].mxu0
    %637 = vmatprep.mubr.f32.mxu0 %v136
    %638 = vmatmul.mubr.f32.gmra.mrb[0].mxu0 %v135
    %v639 = vpop.f32.mrb[0].mxu0
    %v640 = vadd.f32 0.0, %v639
    %v641 = vpop.f32.mrb[0].mxu0
    %642 = vmatprep.mubr.f32.mxu0 %v138
    %643 = vmatmul.mubr.f32.gmra.mrb[0].mxu0 %v137
    %v644 = vpop.f32.mrb[0].mxu0
    %v645 = vadd.f32 0.0, %v644
    %v646 = vpop.f32.mrb[0].mxu0
    %647 = vmatprep.mubr.f32.mxu0 %v140
    %648 = vmatmul.mubr.f32.gmra.mrb[0].mxu0 %v139
    %v649 = vpop.f32.mrb[0].mxu0
    %v650 = vadd.f32 0.0, %v649
    %v651 = vpop.f32.mrb[0].mxu0
    %652 = vmatprep.mubr.f32.mxu0 %v142
    %653 = vmatmul.mubr.f32.gmra.mrb[0].mxu0 %v141
    %v654 = vpop.f32.mrb[0].mxu0
    %v655 = vadd.f32 0.0, %v654
    %v656 = vpop.f32.mrb[0].mxu0
    %657 = vmatprep.mubr.f32.mxu0 %v144
    %658 = vmatmul.mubr.f32.gmra.mrb[0].mxu0 %v143
    %v659 = vpop.f32.mrb[0].mxu0
    %v660 = vadd.f32 0.0, %v659
    %v661 = vpop.f32.mrb[0].mxu0
    %662 = vmatprep.mubr.f32.mxu0 %v146
    %663 = vmatmul.mubr.f32.gmra.mrb[0].mxu0 %v145
    %v664 = vpop.f32.mrb[0].mxu0
    %v665 = vadd.f32 0.0, %v664
    %v666 = vpop.f32.mrb[0].mxu0
    %667 = vmatprep.mubr.f32.mxu0 %v148
    %668 = vmatmul.mubr.f32.gmra.mrb[0].mxu0 %v147
    %v669 = vpop.f32.mrb[0].mxu0
    %v670 = vadd.f32 0.0, %v669
    %v671 = vpop.f32.mrb[0].mxu0
    %672 = vmatprep.mubr.f32.mxu0 %v150
    %673 = vmatmul.mubr.f32.gmra.mrb[0].mxu0 %v149
    %v674 = vpop.f32.mrb[0].mxu0
    %v675 = vadd.f32 0.0, %v674
    %v676 = vpop.f32.mrb[0].mxu0
    %677 = vmatprep.mubr.f32.mxu0 %v152
    %678 = vmatmul.mubr.f32.gmra.mrb[0].mxu0 %v151
    %v679 = vpop.f32.mrb[0].mxu0
    %v680 = vadd.f32 0.0, %v679
    %v681 = vpop.f32.mrb[0].mxu0
    %682 = vdwg.mxu0
    %v683 = vld [vmem:[#allocation7] sm:$0xff]
    %v684 = vld [vmem:[#allocation7 + $0x8] sm:$0xff]
    %v685 = vld [vmem:[#allocation7 + $0x10] sm:$0xff]
    %v686 = vld [vmem:[#allocation7 + $0x18] sm:$0xff]
    %v687 = vld [vmem:[#allocation7 + $0x20] sm:$0xff]
    %v688 = vld [vmem:[#allocation7 + $0x28] sm:$0xff]
    %v689 = vld [vmem:[#allocation7 + $0x30] sm:$0xff]
    %v690 = vld [vmem:[#allocation7 + $0x38] sm:$0xff]
    %v691 = vld [vmem:[#allocation7 + $0x40] sm:$0xff]
    %v692 = vld [vmem:[#allocation7 + $0x48] sm:$0xff]
    %v693 = vld [vmem:[#allocation7 + $0x50] sm:$0xff]
    %v694 = vld [vmem:[#allocation7 + $0x58] sm:$0xff]
    %v695 = vld [vmem:[#allocation7 + $0x60] sm:$0xff]
    %v696 = vld [vmem:[#allocation7 + $0x68] sm:$0xff]
    %v697 = vld [vmem:[#allocation7 + $0x70] sm:$0xff]
    %v698 = vld [vmem:[#allocation7 + $0x78] sm:$0xff]
    %699 = vmatprep.subr.mxu0 0.0
    %700 = vmatpush1.msra.mxu0 %v683
    %701 = vmatprep.subr.mxu0 0.0
    %702 = vmatpush1.msra.mxu0 %v684
    %703 = vmatprep.subr.mxu0 0.0
    %704 = vmatpush1.msra.mxu0 %v685
    %705 = vmatprep.subr.mxu0 0.0
    %706 = vmatpush1.msra.mxu0 %v686
    %707 = vmatprep.subr.mxu0 0.0
    %708 = vmatpush1.msra.mxu0 %v687
    %709 = vmatprep.subr.mxu0 0.0
    %710 = vmatpush1.msra.mxu0 %v688
    %711 = vmatprep.subr.mxu0 0.0
    %712 = vmatpush1.msra.mxu0 %v689
    %713 = vmatprep.subr.mxu0 0.0
    %714 = vmatpush1.msra.mxu0 %v690
    %715 = vmatprep.subr.mxu0 0.0
    %716 = vmatpush1.msra.mxu0 %v691
    %717 = vmatprep.subr.mxu0 0.0
    %718 = vmatpush1.msra.mxu0 %v692
    %719 = vmatprep.subr.mxu0 0.0
    %720 = vmatpush1.msra.mxu0 %v693
    %721 = vmatprep.subr.mxu0 0.0
    %722 = vmatpush1.msra.mxu0 %v694
    %723 = vmatprep.subr.mxu0 0.0
    %724 = vmatpush1.msra.mxu0 %v695
    %725 = vmatprep.subr.mxu0 0.0
    %726 = vmatpush1.msra.mxu0 %v696
    %727 = vmatprep.subr.mxu0 0.0
    %728 = vmatpush1.msra.mxu0 %v697
    %729 = vmatprep.subr.mxu0 0.0
    %730 = vmatpush1.msra.mxu0 %v698
    %731 = vmatprep.subr.mxu0 0.0
    %732 = vmatpush1.msra.mxu0 0.0
    %733 = vmatprep.subr.mxu0 0.0
    %734 = vmatpush1.msra.mxu0 0.0
    %735 = vmatprep.subr.mxu0 0.0
    %736 = vmatpush1.msra.mxu0 0.0
    %737 = vmatprep.subr.mxu0 0.0
    %738 = vmatpush1.msra.mxu0 0.0
    %739 = vmatprep.subr.mxu0 0.0
    %740 = vmatpush1.msra.mxu0 0.0
    %741 = vmatprep.subr.mxu0 0.0
    %742 = vmatpush1.msra.mxu0 0.0
    %743 = vmatprep.subr.mxu0 0.0
    %744 = vmatpush1.msra.mxu0 0.0
    %745 = vmatprep.subr.mxu0 0.0
    %746 = vmatpush1.msra.mxu0 0.0
    %747 = vmatprep.subr.mxu0 0.0
    %748 = vmatpush1.msra.mxu0 0.0
    %749 = vmatprep.subr.mxu0 0.0
    %750 = vmatpush1.msra.mxu0 0.0
    %751 = vmatprep.subr.mxu0 0.0
    %752 = vmatpush1.msra.mxu0 0.0
    %753 = vmatprep.subr.mxu0 0.0
    %754 = vmatpush1.msra.mxu0 0.0
    %755 = vmatprep.subr.mxu0 0.0
    %756 = vmatpush1.msra.mxu0 0.0
    %757 = vmatprep.subr.mxu0 0.0
    %758 = vmatpush1.msra.mxu0 0.0
    %759 = vmatprep.subr.mxu0 0.0
    %760 = vmatpush1.msra.mxu0 0.0
    %761 = vmatprep.subr.mxu0 0.0
    %762 = vmatpush1.msra.mxu0 0.0
    %763 = vmatprep.mubr.f32.mxu0 0.0
    %764 = vmatmul.mubr.f32.gmra.mrb[0].mxu0 %v525
    %v765 = vpop.f32.mrb[0].mxu0
    %v766 = vadd.f32 0.0, %v765
    %v767 = vpop.f32.mrb[0].mxu0
    %768 = vmatprep.mubr.f32.mxu0 0.0
    %769 = vmatmul.mubr.f32.gmra.mrb[0].mxu0 %v530
    %v770 = vpop.f32.mrb[0].mxu0
    %v771 = vadd.f32 0.0, %v770
    %v772 = vpop.f32.mrb[0].mxu0
    %773 = vmatprep.mubr.f32.mxu0 0.0
    %774 = vmatmul.mubr.f32.gmra.mrb[0].mxu0 %v535
    %v775 = vpop.f32.mrb[0].mxu0
    %v776 = vadd.f32 0.0, %v775
    %v777 = vpop.f32.mrb[0].mxu0
    %778 = vmatprep.mubr.f32.mxu0 0.0
    %779 = vmatmul.mubr.f32.gmra.mrb[0].mxu0 %v540
    %v780 = vpop.f32.mrb[0].mxu0
    %v781 = vadd.f32 0.0, %v780
    %v782 = vpop.f32.mrb[0].mxu0
    %783 = vmatprep.mubr.f32.mxu0 0.0
    %784 = vmatmul.mubr.f32.gmra.mrb[0].mxu0 %v545
    %v785 = vpop.f32.mrb[0].mxu0
    %v786 = vadd.f32 0.0, %v785
    %v787 = vpop.f32.mrb[0].mxu0
    %788 = vmatprep.mubr.f32.mxu0 0.0
    %789 = vmatmul.mubr.f32.gmra.mrb[0].mxu0 %v550
    %v790 = vpop.f32.mrb[0].mxu0
    %v791 = vadd.f32 0.0, %v790
    %v792 = vpop.f32.mrb[0].mxu0
    %793 = vmatprep.mubr.f32.mxu0 0.0
    %794 = vmatmul.mubr.f32.gmra.mrb[0].mxu0 %v555
    %v795 = vpop.f32.mrb[0].mxu0
    %v796 = vadd.f32 0.0, %v795
    %v797 = vpop.f32.mrb[0].mxu0
    %798 = vmatprep.mubr.f32.mxu0 0.0
    %799 = vmatmul.mubr.f32.gmra.mrb[0].mxu0 %v560
    %v800 = vpop.f32.mrb[0].mxu0
    %v801 = vadd.f32 0.0, %v800
    %v802 = vpop.f32.mrb[0].mxu0
    %803 = vmatprep.mubr.f32.mxu0 0.0
    %804 = vmatmul.mubr.f32.gmra.mrb[0].mxu0 %v565
    %v805 = vpop.f32.mrb[0].mxu0
    %v806 = vadd.f32 0.0, %v805
    %v807 = vpop.f32.mrb[0].mxu0
    %808 = vmatprep.mubr.f32.mxu0 0.0
    %809 = vmatmul.mubr.f32.gmra.mrb[0].mxu0 %v570
    %v810 = vpop.f32.mrb[0].mxu0
    %v811 = vadd.f32 0.0, %v810
    %v812 = vpop.f32.mrb[0].mxu0
    %813 = vmatprep.mubr.f32.mxu0 0.0
    %814 = vmatmul.mubr.f32.gmra.mrb[0].mxu0 %v575
    %v815 = vpop.f32.mrb[0].mxu0
    %v816 = vadd.f32 0.0, %v815
    %v817 = vpop.f32.mrb[0].mxu0
    %818 = vmatprep.mubr.f32.mxu0 0.0
    %819 = vmatmul.mubr.f32.gmra.mrb[0].mxu0 %v580
    %v820 = vpop.f32.mrb[0].mxu0
    %v821 = vadd.f32 0.0, %v820
    %v822 = vpop.f32.mrb[0].mxu0
    %823 = vmatprep.mubr.f32.mxu0 0.0
    %824 = vmatmul.mubr.f32.gmra.mrb[0].mxu0 %v585
    %v825 = vpop.f32.mrb[0].mxu0
    %v826 = vadd.f32 0.0, %v825
    %v827 = vpop.f32.mrb[0].mxu0
    %828 = vmatprep.mubr.f32.mxu0 0.0
    %829 = vmatmul.mubr.f32.gmra.mrb[0].mxu0 %v590
    %v830 = vpop.f32.mrb[0].mxu0
    %v831 = vadd.f32 0.0, %v830
    %v832 = vpop.f32.mrb[0].mxu0
    %833 = vmatprep.mubr.f32.mxu0 0.0
    %834 = vmatmul.mubr.f32.gmra.mrb[0].mxu0 %v595
    %v835 = vpop.f32.mrb[0].mxu0
    %v836 = vadd.f32 0.0, %v835
    %v837 = vpop.f32.mrb[0].mxu0
    %838 = vmatprep.mubr.f32.mxu0 0.0
    %839 = vmatmul.mubr.f32.gmra.mrb[0].mxu0 %v600
    %v840 = vpop.f32.mrb[0].mxu0
    %v841 = vadd.f32 0.0, %v840
    %v842 = vpop.f32.mrb[0].mxu0
    %843 = vmatprep.mubr.f32.mxu0 0.0
    %844 = vmatmul.mubr.f32.gmra.mrb[0].mxu0 %v605
    %v845 = vpop.f32.mrb[0].mxu0
    %v846 = vadd.f32 0.0, %v845
    %v847 = vpop.f32.mrb[0].mxu0
    %848 = vmatprep.mubr.f32.mxu0 0.0
    %849 = vmatmul.mubr.f32.gmra.mrb[0].mxu0 %v610
    %v850 = vpop.f32.mrb[0].mxu0
    %v851 = vadd.f32 0.0, %v850
    %v852 = vpop.f32.mrb[0].mxu0
    %853 = vmatprep.mubr.f32.mxu0 0.0
    %854 = vmatmul.mubr.f32.gmra.mrb[0].mxu0 %v615
    %v855 = vpop.f32.mrb[0].mxu0
    %v856 = vadd.f32 0.0, %v855
    %v857 = vpop.f32.mrb[0].mxu0
    %858 = vmatprep.mubr.f32.mxu0 0.0
    %859 = vmatmul.mubr.f32.gmra.mrb[0].mxu0 %v620
    %v860 = vpop.f32.mrb[0].mxu0
    %v861 = vadd.f32 0.0, %v860
    %v862 = vpop.f32.mrb[0].mxu0
    %863 = vmatprep.mubr.f32.mxu0 0.0
    %864 = vmatmul.mubr.f32.gmra.mrb[0].mxu0 %v625
    %v865 = vpop.f32.mrb[0].mxu0
    %v866 = vadd.f32 0.0, %v865
    %v867 = vpop.f32.mrb[0].mxu0
    %868 = vmatprep.mubr.f32.mxu0 0.0
    %869 = vmatmul.mubr.f32.gmra.mrb[0].mxu0 %v630
    %v870 = vpop.f32.mrb[0].mxu0
    %v871 = vadd.f32 0.0, %v870
    %v872 = vpop.f32.mrb[0].mxu0
    %873 = vmatprep.mubr.f32.mxu0 0.0
    %874 = vmatmul.mubr.f32.gmra.mrb[0].mxu0 %v635
    %v875 = vpop.f32.mrb[0].mxu0
    %v876 = vadd.f32 0.0, %v875
    %v877 = vpop.f32.mrb[0].mxu0
    %878 = vmatprep.mubr.f32.mxu0 0.0
    %879 = vmatmul.mubr.f32.gmra.mrb[0].mxu0 %v640
    %v880 = vpop.f32.mrb[0].mxu0
    %v881 = vadd.f32 0.0, %v880
    %v882 = vpop.f32.mrb[0].mxu0
    %883 = vmatprep.mubr.f32.mxu0 0.0
    %884 = vmatmul.mubr.f32.gmra.mrb[0].mxu0 %v645
    %v885 = vpop.f32.mrb[0].mxu0
    %v886 = vadd.f32 0.0, %v885
    %v887 = vpop.f32.mrb[0].mxu0
    %888 = vmatprep.mubr.f32.mxu0 0.0
    %889 = vmatmul.mubr.f32.gmra.mrb[0].mxu0 %v650
    %v890 = vpop.f32.mrb[0].mxu0
    %v891 = vadd.f32 0.0, %v890
    %v892 = vpop.f32.mrb[0].mxu0
    %893 = vmatprep.mubr.f32.mxu0 0.0
    %894 = vmatmul.mubr.f32.gmra.mrb[0].mxu0 %v655
    %v895 = vpop.f32.mrb[0].mxu0
    %v896 = vadd.f32 0.0, %v895
    %v897 = vpop.f32.mrb[0].mxu0
    %898 = vmatprep.mubr.f32.mxu0 0.0
    %899 = vmatmul.mubr.f32.gmra.mrb[0].mxu0 %v660
    %v900 = vpop.f32.mrb[0].mxu0
    %v901 = vadd.f32 0.0, %v900
    %v902 = vpop.f32.mrb[0].mxu0
    %903 = vmatprep.mubr.f32.mxu0 0.0
    %904 = vmatmul.mubr.f32.gmra.mrb[0].mxu0 %v665
    %v905 = vpop.f32.mrb[0].mxu0
    %v906 = vadd.f32 0.0, %v905
    %v907 = vpop.f32.mrb[0].mxu0
    %908 = vmatprep.mubr.f32.mxu0 0.0
    %909 = vmatmul.mubr.f32.gmra.mrb[0].mxu0 %v670
    %v910 = vpop.f32.mrb[0].mxu0
    %v911 = vadd.f32 0.0, %v910
    %v912 = vpop.f32.mrb[0].mxu0
    %913 = vmatprep.mubr.f32.mxu0 0.0
    %914 = vmatmul.mubr.f32.gmra.mrb[0].mxu0 %v675
    %v915 = vpop.f32.mrb[0].mxu0
    %v916 = vadd.f32 0.0, %v915
    %v917 = vpop.f32.mrb[0].mxu0
    %918 = vmatprep.mubr.f32.mxu0 0.0
    %919 = vmatmul.mubr.f32.gmra.mrb[0].mxu0 %v680
    %v920 = vpop.f32.mrb[0].mxu0
    %v921 = vadd.f32 0.0, %v920
    %v922 = vpop.f32.mrb[0].mxu0
    %923 = vdwg.mxu0
    %v924 = vtanh.pop %v766
    %v925 = vtanh.pop %v771
    %v926 = vtanh.pop %v776
    %v927 = vtanh.pop %v781
    %v928 = vtanh.pop %v786
    %v929 = vtanh.pop %v791
    %v930 = vtanh.pop %v796
    %v931 = vtanh.pop %v801
    %v932 = vtanh.pop %v806
    %v933 = vtanh.pop %v811
    %v934 = vtanh.pop %v816
    %v935 = vtanh.pop %v821
    %v936 = vtanh.pop %v826
    %v937 = vtanh.pop %v831
    %v938 = vtanh.pop %v836
    %v939 = vtanh.pop %v841
    %v940 = vtanh.pop %v846
    %v941 = vtanh.pop %v851
    %v942 = vtanh.pop %v856
    %v943 = vtanh.pop %v861
    %v944 = vtanh.pop %v866
    %v945 = vtanh.pop %v871
    %v946 = vtanh.pop %v876
    %v947 = vtanh.pop %v881
    %v948 = vtanh.pop %v886
    %v949 = vtanh.pop %v891
    %v950 = vtanh.pop %v896
    %v951 = vtanh.pop %v901
    %v952 = vtanh.pop %v906
    %v953 = vtanh.pop %v911
    %v954 = vtanh.pop %v916
    %v955 = vtanh.pop %v921
    %956 = vmatprep.subr.mxu0 0.0
    %957 = vmatpush1.msra.mxu0 %v924
    %958 = vmatprep.subr.mxu0 0.0
    %959 = vmatpush1.msra.mxu0 %v925
    %960 = vmatprep.subr.mxu0 0.0
    %961 = vmatpush1.msra.mxu0 %v926
    %962 = vmatprep.subr.mxu0 0.0
    %963 = vmatpush1.msra.mxu0 %v927
    %964 = vmatprep.subr.mxu0 0.0
    %965 = vmatpush1.msra.mxu0 %v928
    %966 = vmatprep.subr.mxu0 0.0
    %967 = vmatpush1.msra.mxu0 %v929
    %968 = vmatprep.subr.mxu0 0.0
    %969 = vmatpush1.msra.mxu0 %v930
    %970 = vmatprep.subr.mxu0 0.0
    %971 = vmatpush1.msra.mxu0 %v931
    %972 = vmatprep.subr.mxu0 0.0
    %973 = vmatpush1.msra.mxu0 %v932
    %974 = vmatprep.subr.mxu0 0.0
    %975 = vmatpush1.msra.mxu0 %v933
    %976 = vmatprep.subr.mxu0 0.0
    %977 = vmatpush1.msra.mxu0 %v934
    %978 = vmatprep.subr.mxu0 0.0
    %979 = vmatpush1.msra.mxu0 %v935
    %980 = vmatprep.subr.mxu0 0.0
    %981 = vmatpush1.msra.mxu0 %v936
    %982 = vmatprep.subr.mxu0 0.0
    %983 = vmatpush1.msra.mxu0 %v937
    %984 = vmatprep.subr.mxu0 0.0
    %985 = vmatpush1.msra.mxu0 %v938
    %986 = vmatprep.subr.mxu0 0.0
    %987 = vmatpush1.msra.mxu0 %v939
    %988 = vmatprep.subr.mxu0 0.0
    %989 = vmatpush1.msra.mxu0 %v940
    %990 = vmatprep.subr.mxu0 0.0
    %991 = vmatpush1.msra.mxu0 %v941
    %992 = vmatprep.subr.mxu0 0.0
    %993 = vmatpush1.msra.mxu0 %v942
    %994 = vmatprep.subr.mxu0 0.0
    %995 = vmatpush1.msra.mxu0 %v943
    %996 = vmatprep.subr.mxu0 0.0
    %997 = vmatpush1.msra.mxu0 %v944
    %998 = vmatprep.subr.mxu0 0.0
    %999 = vmatpush1.msra.mxu0 %v945
    %1000 = vmatprep.subr.mxu0 0.0
    %1001 = vmatpush1.msra.mxu0 %v946
    %1002 = vmatprep.subr.mxu0 0.0
    %1003 = vmatpush1.msra.mxu0 %v947
    %1004 = vmatprep.subr.mxu0 0.0
    %1005 = vmatpush1.msra.mxu0 %v948
    %1006 = vmatprep.subr.mxu0 0.0
    %1007 = vmatpush1.msra.mxu0 %v949
    %1008 = vmatprep.subr.mxu0 0.0
    %1009 = vmatpush1.msra.mxu0 %v950
    %1010 = vmatprep.subr.mxu0 0.0
    %1011 = vmatpush1.msra.mxu0 %v951
    %1012 = vmatprep.subr.mxu0 0.0
    %1013 = vmatpush1.msra.mxu0 %v952
    %1014 = vmatprep.subr.mxu0 0.0
    %1015 = vmatpush1.msra.mxu0 %v953
    %1016 = vmatprep.subr.mxu0 0.0
    %1017 = vmatpush1.msra.mxu0 %v954
    %1018 = vmatprep.subr.mxu0 0.0
    %1019 = vmatpush1.msra.mxu0 %v955
    %1020 = vmatprep.mubr.f32.mxu0 %v90
    %1021 = vmatmul.mubr.f32.gmra.mrb[0].mxu0 %v89
    %v1022 = vpop.f32.mrb[0].mxu0
    %v1023 = vadd.f32 0.0, %v1022
    %v1024 = vpop.f32.mrb[0].mxu0
    %1025 = vmatprep.mubr.f32.mxu0 %v92
    %1026 = vmatmul.mubr.f32.gmra.mrb[0].mxu0 %v91
    %v1027 = vpop.f32.mrb[0].mxu0
    %v1028 = vadd.f32 0.0, %v1027
    %v1029 = vpop.f32.mrb[0].mxu0
    %1030 = vmatprep.mubr.f32.mxu0 %v94
    %1031 = vmatmul.mubr.f32.gmra.mrb[0].mxu0 %v93
    %v1032 = vpop.f32.mrb[0].mxu0
    %v1033 = vadd.f32 0.0, %v1032
    %v1034 = vpop.f32.mrb[0].mxu0
    %1035 = vmatprep.mubr.f32.mxu0 %v96
    %1036 = vmatmul.mubr.f32.gmra.mrb[0].mxu0 %v95
    %v1037 = vpop.f32.mrb[0].mxu0
    %v1038 = vadd.f32 0.0, %v1037
    %v1039 = vpop.f32.mrb[0].mxu0
    %1040 = vmatprep.mubr.f32.mxu0 %v98
    %1041 = vmatmul.mubr.f32.gmra.mrb[0].mxu0 %v97
    %v1042 = vpop.f32.mrb[0].mxu0
    %v1043 = vadd.f32 0.0, %v1042
    %v1044 = vpop.f32.mrb[0].mxu0
    %1045 = vmatprep.mubr.f32.mxu0 %v100
    %1046 = vmatmul.mubr.f32.gmra.mrb[0].mxu0 %v99
    %v1047 = vpop.f32.mrb[0].mxu0
    %v1048 = vadd.f32 0.0, %v1047
    %v1049 = vpop.f32.mrb[0].mxu0
    %1050 = vmatprep.mubr.f32.mxu0 %v102
    %1051 = vmatmul.mubr.f32.gmra.mrb[0].mxu0 %v101
    %v1052 = vpop.f32.mrb[0].mxu0
    %v1053 = vadd.f32 0.0, %v1052
    %v1054 = vpop.f32.mrb[0].mxu0
    %1055 = vmatprep.mubr.f32.mxu0 %v104
    %1056 = vmatmul.mubr.f32.gmra.mrb[0].mxu0 %v103
    %v1057 = vpop.f32.mrb[0].mxu0
    %v1058 = vadd.f32 0.0, %v1057
    %v1059 = vpop.f32.mrb[0].mxu0
    %1060 = vmatprep.mubr.f32.mxu0 %v106
    %1061 = vmatmul.mubr.f32.gmra.mrb[0].mxu0 %v105
    %v1062 = vpop.f32.mrb[0].mxu0
    %v1063 = vadd.f32 0.0, %v1062
    %v1064 = vpop.f32.mrb[0].mxu0
    %1065 = vmatprep.mubr.f32.mxu0 %v108
    %1066 = vmatmul.mubr.f32.gmra.mrb[0].mxu0 %v107
    %v1067 = vpop.f32.mrb[0].mxu0
    %v1068 = vadd.f32 0.0, %v1067
    %v1069 = vpop.f32.mrb[0].mxu0
    %1070 = vmatprep.mubr.f32.mxu0 %v110
    %1071 = vmatmul.mubr.f32.gmra.mrb[0].mxu0 %v109
    %v1072 = vpop.f32.mrb[0].mxu0
    %v1073 = vadd.f32 0.0, %v1072
    %v1074 = vpop.f32.mrb[0].mxu0
    %1075 = vmatprep.mubr.f32.mxu0 %v112
    %1076 = vmatmul.mubr.f32.gmra.mrb[0].mxu0 %v111
    %v1077 = vpop.f32.mrb[0].mxu0
    %v1078 = vadd.f32 0.0, %v1077
    %v1079 = vpop.f32.mrb[0].mxu0
    %1080 = vmatprep.mubr.f32.mxu0 %v114
    %1081 = vmatmul.mubr.f32.gmra.mrb[0].mxu0 %v113
    %v1082 = vpop.f32.mrb[0].mxu0
    %v1083 = vadd.f32 0.0, %v1082
    %v1084 = vpop.f32.mrb[0].mxu0
    %1085 = vmatprep.mubr.f32.mxu0 %v116
    %1086 = vmatmul.mubr.f32.gmra.mrb[0].mxu0 %v115
    %v1087 = vpop.f32.mrb[0].mxu0
    %v1088 = vadd.f32 0.0, %v1087
    %v1089 = vpop.f32.mrb[0].mxu0
    %1090 = vmatprep.mubr.f32.mxu0 %v118
    %1091 = vmatmul.mubr.f32.gmra.mrb[0].mxu0 %v117
    %v1092 = vpop.f32.mrb[0].mxu0
    %v1093 = vadd.f32 0.0, %v1092
    %v1094 = vpop.f32.mrb[0].mxu0
    %1095 = vmatprep.mubr.f32.mxu0 %v120
    %1096 = vmatmul.mubr.f32.gmra.mrb[0].mxu0 %v119
    %v1097 = vpop.f32.mrb[0].mxu0
    %v1098 = vadd.f32 0.0, %v1097
    %v1099 = vpop.f32.mrb[0].mxu0
    %1100 = vmatprep.mubr.f32.mxu0 %v122
    %1101 = vmatmul.mubr.f32.gmra.mrb[0].mxu0 %v121
    %v1102 = vpop.f32.mrb[0].mxu0
    %v1103 = vadd.f32 0.0, %v1102
    %v1104 = vpop.f32.mrb[0].mxu0
    %1105 = vmatprep.mubr.f32.mxu0 %v124
    %1106 = vmatmul.mubr.f32.gmra.mrb[0].mxu0 %v123
    %v1107 = vpop.f32.mrb[0].mxu0
    %v1108 = vadd.f32 0.0, %v1107
    %v1109 = vpop.f32.mrb[0].mxu0
    %1110 = vmatprep.mubr.f32.mxu0 %v126
    %1111 = vmatmul.mubr.f32.gmra.mrb[0].mxu0 %v125
    %v1112 = vpop.f32.mrb[0].mxu0
    %v1113 = vadd.f32 0.0, %v1112
    %v1114 = vpop.f32.mrb[0].mxu0
    %1115 = vmatprep.mubr.f32.mxu0 %v128
    %1116 = vmatmul.mubr.f32.gmra.mrb[0].mxu0 %v127
    %v1117 = vpop.f32.mrb[0].mxu0
    %v1118 = vadd.f32 0.0, %v1117
    %v1119 = vpop.f32.mrb[0].mxu0
    %1120 = vmatprep.mubr.f32.mxu0 %v130
    %1121 = vmatmul.mubr.f32.gmra.mrb[0].mxu0 %v129
    %v1122 = vpop.f32.mrb[0].mxu0
    %v1123 = vadd.f32 0.0, %v1122
    %v1124 = vpop.f32.mrb[0].mxu0
    %1125 = vmatprep.mubr.f32.mxu0 %v132
    %1126 = vmatmul.mubr.f32.gmra.mrb[0].mxu0 %v131
    %v1127 = vpop.f32.mrb[0].mxu0
    %v1128 = vadd.f32 0.0, %v1127
    %v1129 = vpop.f32.mrb[0].mxu0
    %1130 = vmatprep.mubr.f32.mxu0 %v134
    %1131 = vmatmul.mubr.f32.gmra.mrb[0].mxu0 %v133
    %v1132 = vpop.f32.mrb[0].mxu0
    %v1133 = vadd.f32 0.0, %v1132
    %v1134 = vpop.f32.mrb[0].mxu0
    %1135 = vmatprep.mubr.f32.mxu0 %v136
    %1136 = vmatmul.mubr.f32.gmra.mrb[0].mxu0 %v135
    %v1137 = vpop.f32.mrb[0].mxu0
    %v1138 = vadd.f32 0.0, %v1137
    %v1139 = vpop.f32.mrb[0].mxu0
    %1140 = vmatprep.mubr.f32.mxu0 %v138
    %1141 = vmatmul.mubr.f32.gmra.mrb[0].mxu0 %v137
    %v1142 = vpop.f32.mrb[0].mxu0
    %v1143 = vadd.f32 0.0, %v1142
    %v1144 = vpop.f32.mrb[0].mxu0
    %1145 = vmatprep.mubr.f32.mxu0 %v140
    %1146 = vmatmul.mubr.f32.gmra.mrb[0].mxu0 %v139
    %v1147 = vpop.f32.mrb[0].mxu0
    %v1148 = vadd.f32 0.0, %v1147
    %v1149 = vpop.f32.mrb[0].mxu0
    %1150 = vmatprep.mubr.f32.mxu0 %v142
    %1151 = vmatmul.mubr.f32.gmra.mrb[0].mxu0 %v141
    %v1152 = vpop.f32.mrb[0].mxu0
    %v1153 = vadd.f32 0.0, %v1152
    %v1154 = vpop.f32.mrb[0].mxu0
    %1155 = vmatprep.mubr.f32.mxu0 %v144
    %1156 = vmatmul.mubr.f32.gmra.mrb[0].mxu0 %v143
    %v1157 = vpop.f32.mrb[0].mxu0
    %v1158 = vadd.f32 0.0, %v1157
    %v1159 = vpop.f32.mrb[0].mxu0
    %1160 = vmatprep.mubr.f32.mxu0 %v146
    %1161 = vmatmul.mubr.f32.gmra.mrb[0].mxu0 %v145
    %v1162 = vpop.f32.mrb[0].mxu0
    %v1163 = vadd.f32 0.0, %v1162
    %v1164 = vpop.f32.mrb[0].mxu0
    %1165 = vmatprep.mubr.f32.mxu0 %v148
    %1166 = vmatmul.mubr.f32.gmra.mrb[0].mxu0 %v147
    %v1167 = vpop.f32.mrb[0].mxu0
    %v1168 = vadd.f32 0.0, %v1167
    %v1169 = vpop.f32.mrb[0].mxu0
    %1170 = vmatprep.mubr.f32.mxu0 %v150
    %1171 = vmatmul.mubr.f32.gmra.mrb[0].mxu0 %v149
    %v1172 = vpop.f32.mrb[0].mxu0
    %v1173 = vadd.f32 0.0, %v1172
    %v1174 = vpop.f32.mrb[0].mxu0
    %1175 = vmatprep.mubr.f32.mxu0 %v152
    %1176 = vmatmul.mubr.f32.gmra.mrb[0].mxu0 %v151
    %v1177 = vpop.f32.mrb[0].mxu0
    %v1178 = vadd.f32 0.0, %v1177
    %v1179 = vpop.f32.mrb[0].mxu0
    %1180 = vdwg.mxu0
    %v1181 = vld [vmem:[#allocation8] sm:$0xff]
    %v1182 = vld [vmem:[#allocation8 + $0x8] sm:$0xff]
    %v1183 = vld [vmem:[#allocation8 + $0x10] sm:$0xff]
    %v1184 = vld [vmem:[#allocation8 + $0x18] sm:$0xff]
    %v1185 = vld [vmem:[#allocation8 + $0x20] sm:$0xff]
    %v1186 = vld [vmem:[#allocation8 + $0x28] sm:$0xff]
    %v1187 = vld [vmem:[#allocation8 + $0x30] sm:$0xff]
    %v1188 = vld [vmem:[#allocation8 + $0x38] sm:$0xff]
    %v1189 = vld [vmem:[#allocation8 + $0x40] sm:$0xff]
    %v1190 = vld [vmem:[#allocation8 + $0x48] sm:$0xff]
    %v1191 = vld [vmem:[#allocation8 + $0x50] sm:$0xff]
    %v1192 = vld [vmem:[#allocation8 + $0x58] sm:$0xff]
    %v1193 = vld [vmem:[#allocation8 + $0x60] sm:$0xff]
    %v1194 = vld [vmem:[#allocation8 + $0x68] sm:$0xff]
    %v1195 = vld [vmem:[#allocation8 + $0x70] sm:$0xff]
    %v1196 = vld [vmem:[#allocation8 + $0x78] sm:$0xff]
    %1197 = vmatprep.subr.mxu0 0.0
    %1198 = vmatpush1.msra.mxu0 %v1181
    %1199 = vmatprep.subr.mxu0 0.0
    %1200 = vmatpush1.msra.mxu0 %v1182
    %1201 = vmatprep.subr.mxu0 0.0
    %1202 = vmatpush1.msra.mxu0 %v1183
    %1203 = vmatprep.subr.mxu0 0.0
    %1204 = vmatpush1.msra.mxu0 %v1184
    %1205 = vmatprep.subr.mxu0 0.0
    %1206 = vmatpush1.msra.mxu0 %v1185
    %1207 = vmatprep.subr.mxu0 0.0
    %1208 = vmatpush1.msra.mxu0 %v1186
    %1209 = vmatprep.subr.mxu0 0.0
    %1210 = vmatpush1.msra.mxu0 %v1187
    %1211 = vmatprep.subr.mxu0 0.0
    %1212 = vmatpush1.msra.mxu0 %v1188
    %1213 = vmatprep.subr.mxu0 0.0
    %1214 = vmatpush1.msra.mxu0 %v1189
    %1215 = vmatprep.subr.mxu0 0.0
    %1216 = vmatpush1.msra.mxu0 %v1190
    %1217 = vmatprep.subr.mxu0 0.0
    %1218 = vmatpush1.msra.mxu0 %v1191
    %1219 = vmatprep.subr.mxu0 0.0
    %1220 = vmatpush1.msra.mxu0 %v1192
    %1221 = vmatprep.subr.mxu0 0.0
    %1222 = vmatpush1.msra.mxu0 %v1193
    %1223 = vmatprep.subr.mxu0 0.0
    %1224 = vmatpush1.msra.mxu0 %v1194
    %1225 = vmatprep.subr.mxu0 0.0
    %1226 = vmatpush1.msra.mxu0 %v1195
    %1227 = vmatprep.subr.mxu0 0.0
    %1228 = vmatpush1.msra.mxu0 %v1196
    %1229 = vmatprep.subr.mxu0 0.0
    %1230 = vmatpush1.msra.mxu0 0.0
    %1231 = vmatprep.subr.mxu0 0.0
    %1232 = vmatpush1.msra.mxu0 0.0
    %1233 = vmatprep.subr.mxu0 0.0
    %1234 = vmatpush1.msra.mxu0 0.0
    %1235 = vmatprep.subr.mxu0 0.0
    %1236 = vmatpush1.msra.mxu0 0.0
    %1237 = vmatprep.subr.mxu0 0.0
    %1238 = vmatpush1.msra.mxu0 0.0
    %1239 = vmatprep.subr.mxu0 0.0
    %1240 = vmatpush1.msra.mxu0 0.0
    %1241 = vmatprep.subr.mxu0 0.0
    %1242 = vmatpush1.msra.mxu0 0.0
    %1243 = vmatprep.subr.mxu0 0.0
    %1244 = vmatpush1.msra.mxu0 0.0
    %1245 = vmatprep.subr.mxu0 0.0
    %1246 = vmatpush1.msra.mxu0 0.0
    %1247 = vmatprep.subr.mxu0 0.0
    %1248 = vmatpush1.msra.mxu0 0.0
    %1249 = vmatprep.subr.mxu0 0.0
    %1250 = vmatpush1.msra.mxu0 0.0
    %1251 = vmatprep.subr.mxu0 0.0
    %1252 = vmatpush1.msra.mxu0 0.0
    %1253 = vmatprep.subr.mxu0 0.0
    %1254 = vmatpush1.msra.mxu0 0.0
    %1255 = vmatprep.subr.mxu0 0.0
    %1256 = vmatpush1.msra.mxu0 0.0
    %1257 = vmatprep.subr.mxu0 0.0
    %1258 = vmatpush1.msra.mxu0 0.0
    %1259 = vmatprep.subr.mxu0 0.0
    %1260 = vmatpush1.msra.mxu0 0.0
    %1261 = vmatprep.mubr.f32.mxu0 0.0
    %1262 = vmatmul.mubr.f32.gmra.mrb[0].mxu0 %v1023
    %v1263 = vpop.f32.mrb[0].mxu0
    %v1264 = vadd.f32 0.0, %v1263
    %v1265 = vpop.f32.mrb[0].mxu0
    %1266 = vmatprep.mubr.f32.mxu0 0.0
    %1267 = vmatmul.mubr.f32.gmra.mrb[0].mxu0 %v1028
    %v1268 = vpop.f32.mrb[0].mxu0
    %v1269 = vadd.f32 0.0, %v1268
    %v1270 = vpop.f32.mrb[0].mxu0
    %1271 = vmatprep.mubr.f32.mxu0 0.0
    %1272 = vmatmul.mubr.f32.gmra.mrb[0].mxu0 %v1033
    %v1273 = vpop.f32.mrb[0].mxu0
    %v1274 = vadd.f32 0.0, %v1273
    %v1275 = vpop.f32.mrb[0].mxu0
    %1276 = vmatprep.mubr.f32.mxu0 0.0
    %1277 = vmatmul.mubr.f32.gmra.mrb[0].mxu0 %v1038
    %v1278 = vpop.f32.mrb[0].mxu0
    %v1279 = vadd.f32 0.0, %v1278
    %v1280 = vpop.f32.mrb[0].mxu0
    %1281 = vmatprep.mubr.f32.mxu0 0.0
    %1282 = vmatmul.mubr.f32.gmra.mrb[0].mxu0 %v1043
    %v1283 = vpop.f32.mrb[0].mxu0
    %v1284 = vadd.f32 0.0, %v1283
    %v1285 = vpop.f32.mrb[0].mxu0
    %1286 = vmatprep.mubr.f32.mxu0 0.0
    %1287 = vmatmul.mubr.f32.gmra.mrb[0].mxu0 %v1048
    %v1288 = vpop.f32.mrb[0].mxu0
    %v1289 = vadd.f32 0.0, %v1288
    %v1290 = vpop.f32.mrb[0].mxu0
    %1291 = vmatprep.mubr.f32.mxu0 0.0
    %1292 = vmatmul.mubr.f32.gmra.mrb[0].mxu0 %v1053
    %v1293 = vpop.f32.mrb[0].mxu0
    %v1294 = vadd.f32 0.0, %v1293
    %v1295 = vpop.f32.mrb[0].mxu0
    %1296 = vmatprep.mubr.f32.mxu0 0.0
    %1297 = vmatmul.mubr.f32.gmra.mrb[0].mxu0 %v1058
    %v1298 = vpop.f32.mrb[0].mxu0
    %v1299 = vadd.f32 0.0, %v1298
    %v1300 = vpop.f32.mrb[0].mxu0
    %1301 = vmatprep.mubr.f32.mxu0 0.0
    %1302 = vmatmul.mubr.f32.gmra.mrb[0].mxu0 %v1063
    %v1303 = vpop.f32.mrb[0].mxu0
    %v1304 = vadd.f32 0.0, %v1303
    %v1305 = vpop.f32.mrb[0].mxu0
    %1306 = vmatprep.mubr.f32.mxu0 0.0
    %1307 = vmatmul.mubr.f32.gmra.mrb[0].mxu0 %v1068
    %v1308 = vpop.f32.mrb[0].mxu0
    %v1309 = vadd.f32 0.0, %v1308
    %v1310 = vpop.f32.mrb[0].mxu0
    %1311 = vmatprep.mubr.f32.mxu0 0.0
    %1312 = vmatmul.mubr.f32.gmra.mrb[0].mxu0 %v1073
    %v1313 = vpop.f32.mrb[0].mxu0
    %v1314 = vadd.f32 0.0, %v1313
    %v1315 = vpop.f32.mrb[0].mxu0
    %1316 = vmatprep.mubr.f32.mxu0 0.0
    %1317 = vmatmul.mubr.f32.gmra.mrb[0].mxu0 %v1078
    %v1318 = vpop.f32.mrb[0].mxu0
    %v1319 = vadd.f32 0.0, %v1318
    %v1320 = vpop.f32.mrb[0].mxu0
    %1321 = vmatprep.mubr.f32.mxu0 0.0
    %1322 = vmatmul.mubr.f32.gmra.mrb[0].mxu0 %v1083
    %v1323 = vpop.f32.mrb[0].mxu0
    %v1324 = vadd.f32 0.0, %v1323
    %v1325 = vpop.f32.mrb[0].mxu0
    %1326 = vmatprep.mubr.f32.mxu0 0.0
    %1327 = vmatmul.mubr.f32.gmra.mrb[0].mxu0 %v1088
    %v1328 = vpop.f32.mrb[0].mxu0
    %v1329 = vadd.f32 0.0, %v1328
    %v1330 = vpop.f32.mrb[0].mxu0
    %1331 = vmatprep.mubr.f32.mxu0 0.0
    %1332 = vmatmul.mubr.f32.gmra.mrb[0].mxu0 %v1093
    %v1333 = vpop.f32.mrb[0].mxu0
    %v1334 = vadd.f32 0.0, %v1333
    %v1335 = vpop.f32.mrb[0].mxu0
    %1336 = vmatprep.mubr.f32.mxu0 0.0
    %1337 = vmatmul.mubr.f32.gmra.mrb[0].mxu0 %v1098
    %v1338 = vpop.f32.mrb[0].mxu0
    %v1339 = vadd.f32 0.0, %v1338
    %v1340 = vpop.f32.mrb[0].mxu0
    %1341 = vmatprep.mubr.f32.mxu0 0.0
    %1342 = vmatmul.mubr.f32.gmra.mrb[0].mxu0 %v1103
    %v1343 = vpop.f32.mrb[0].mxu0
    %v1344 = vadd.f32 0.0, %v1343
    %v1345 = vpop.f32.mrb[0].mxu0
    %1346 = vmatprep.mubr.f32.mxu0 0.0
    %1347 = vmatmul.mubr.f32.gmra.mrb[0].mxu0 %v1108
    %v1348 = vpop.f32.mrb[0].mxu0
    %v1349 = vadd.f32 0.0, %v1348
    %v1350 = vpop.f32.mrb[0].mxu0
    %1351 = vmatprep.mubr.f32.mxu0 0.0
    %1352 = vmatmul.mubr.f32.gmra.mrb[0].mxu0 %v1113
    %v1353 = vpop.f32.mrb[0].mxu0
    %v1354 = vadd.f32 0.0, %v1353
    %v1355 = vpop.f32.mrb[0].mxu0
    %1356 = vmatprep.mubr.f32.mxu0 0.0
    %1357 = vmatmul.mubr.f32.gmra.mrb[0].mxu0 %v1118
    %v1358 = vpop.f32.mrb[0].mxu0
    %v1359 = vadd.f32 0.0, %v1358
    %v1360 = vpop.f32.mrb[0].mxu0
    %1361 = vmatprep.mubr.f32.mxu0 0.0
    %1362 = vmatmul.mubr.f32.gmra.mrb[0].mxu0 %v1123
    %v1363 = vpop.f32.mrb[0].mxu0
    %v1364 = vadd.f32 0.0, %v1363
    %v1365 = vpop.f32.mrb[0].mxu0
    %1366 = vmatprep.mubr.f32.mxu0 0.0
    %1367 = vmatmul.mubr.f32.gmra.mrb[0].mxu0 %v1128
    %v1368 = vpop.f32.mrb[0].mxu0
    %v1369 = vadd.f32 0.0, %v1368
    %v1370 = vpop.f32.mrb[0].mxu0
    %1371 = vmatprep.mubr.f32.mxu0 0.0
    %1372 = vmatmul.mubr.f32.gmra.mrb[0].mxu0 %v1133
    %v1373 = vpop.f32.mrb[0].mxu0
    %v1374 = vadd.f32 0.0, %v1373
    %v1375 = vpop.f32.mrb[0].mxu0
    %1376 = vmatprep.mubr.f32.mxu0 0.0
    %1377 = vmatmul.mubr.f32.gmra.mrb[0].mxu0 %v1138
    %v1378 = vpop.f32.mrb[0].mxu0
    %v1379 = vadd.f32 0.0, %v1378
    %v1380 = vpop.f32.mrb[0].mxu0
    %1381 = vmatprep.mubr.f32.mxu0 0.0
    %1382 = vmatmul.mubr.f32.gmra.mrb[0].mxu0 %v1143
    %v1383 = vpop.f32.mrb[0].mxu0
    %v1384 = vadd.f32 0.0, %v1383
    %v1385 = vpop.f32.mrb[0].mxu0
    %1386 = vmatprep.mubr.f32.mxu0 0.0
    %1387 = vmatmul.mubr.f32.gmra.mrb[0].mxu0 %v1148
    %v1388 = vpop.f32.mrb[0].mxu0
    %v1389 = vadd.f32 0.0, %v1388
    %v1390 = vpop.f32.mrb[0].mxu0
    %1391 = vmatprep.mubr.f32.mxu0 0.0
    %1392 = vmatmul.mubr.f32.gmra.mrb[0].mxu0 %v1153
    %v1393 = vpop.f32.mrb[0].mxu0
    %v1394 = vadd.f32 0.0, %v1393
    %v1395 = vpop.f32.mrb[0].mxu0
    %1396 = vmatprep.mubr.f32.mxu0 0.0
    %1397 = vmatmul.mubr.f32.gmra.mrb[0].mxu0 %v1158
    %v1398 = vpop.f32.mrb[0].mxu0
    %v1399 = vadd.f32 0.0, %v1398
    %v1400 = vpop.f32.mrb[0].mxu0
    %1401 = vmatprep.mubr.f32.mxu0 0.0
    %1402 = vmatmul.mubr.f32.gmra.mrb[0].mxu0 %v1163
    %v1403 = vpop.f32.mrb[0].mxu0
    %v1404 = vadd.f32 0.0, %v1403
    %v1405 = vpop.f32.mrb[0].mxu0
    %1406 = vmatprep.mubr.f32.mxu0 0.0
    %1407 = vmatmul.mubr.f32.gmra.mrb[0].mxu0 %v1168
    %v1408 = vpop.f32.mrb[0].mxu0
    %v1409 = vadd.f32 0.0, %v1408
    %v1410 = vpop.f32.mrb[0].mxu0
    %1411 = vmatprep.mubr.f32.mxu0 0.0
    %1412 = vmatmul.mubr.f32.gmra.mrb[0].mxu0 %v1173
    %v1413 = vpop.f32.mrb[0].mxu0
    %v1414 = vadd.f32 0.0, %v1413
    %v1415 = vpop.f32.mrb[0].mxu0
    %1416 = vmatprep.mubr.f32.mxu0 0.0
    %1417 = vmatmul.mubr.f32.gmra.mrb[0].mxu0 %v1178
    %v1418 = vpop.f32.mrb[0].mxu0
    %v1419 = vadd.f32 0.0, %v1418
    %v1420 = vpop.f32.mrb[0].mxu0
    %1421 = vdwg.mxu0
    %1422 = vmatprep.subr.mxu0 0.0
    %1423 = vmatpush1.msra.mxu0 %v1264
    %1424 = vmatprep.subr.mxu0 0.0
    %1425 = vmatpush1.msra.mxu0 %v1269
    %1426 = vmatprep.subr.mxu0 0.0
    %1427 = vmatpush1.msra.mxu0 %v1274
    %1428 = vmatprep.subr.mxu0 0.0
    %1429 = vmatpush1.msra.mxu0 %v1279
    %1430 = vmatprep.subr.mxu0 0.0
    %1431 = vmatpush1.msra.mxu0 %v1284
    %1432 = vmatprep.subr.mxu0 0.0
    %1433 = vmatpush1.msra.mxu0 %v1289
    %1434 = vmatprep.subr.mxu0 0.0
    %1435 = vmatpush1.msra.mxu0 %v1294
    %1436 = vmatprep.subr.mxu0 0.0
    %1437 = vmatpush1.msra.mxu0 %v1299
    %1438 = vmatprep.subr.mxu0 0.0
    %1439 = vmatpush1.msra.mxu0 %v1304
    %1440 = vmatprep.subr.mxu0 0.0
    %1441 = vmatpush1.msra.mxu0 %v1309
    %1442 = vmatprep.subr.mxu0 0.0
    %1443 = vmatpush1.msra.mxu0 %v1314
    %1444 = vmatprep.subr.mxu0 0.0
    %1445 = vmatpush1.msra.mxu0 %v1319
    %1446 = vmatprep.subr.mxu0 0.0
    %1447 = vmatpush1.msra.mxu0 %v1324
    %1448 = vmatprep.subr.mxu0 0.0
    %1449 = vmatpush1.msra.mxu0 %v1329
    %1450 = vmatprep.subr.mxu0 0.0
    %1451 = vmatpush1.msra.mxu0 %v1334
    %1452 = vmatprep.subr.mxu0 0.0
    %1453 = vmatpush1.msra.mxu0 %v1339
    %1454 = vmatprep.subr.mxu0 0.0
    %1455 = vmatpush1.msra.mxu0 %v1344
    %1456 = vmatprep.subr.mxu0 0.0
    %1457 = vmatpush1.msra.mxu0 %v1349
    %1458 = vmatprep.subr.mxu0 0.0
    %1459 = vmatpush1.msra.mxu0 %v1354
    %1460 = vmatprep.subr.mxu0 0.0
    %1461 = vmatpush1.msra.mxu0 %v1359
    %1462 = vmatprep.subr.mxu0 0.0
    %1463 = vmatpush1.msra.mxu0 %v1364
    %1464 = vmatprep.subr.mxu0 0.0
    %1465 = vmatpush1.msra.mxu0 %v1369
    %1466 = vmatprep.subr.mxu0 0.0
    %1467 = vmatpush1.msra.mxu0 %v1374
    %1468 = vmatprep.subr.mxu0 0.0
    %1469 = vmatpush1.msra.mxu0 %v1379
    %1470 = vmatprep.subr.mxu0 0.0
    %1471 = vmatpush1.msra.mxu0 %v1384
    %1472 = vmatprep.subr.mxu0 0.0
    %1473 = vmatpush1.msra.mxu0 %v1389
    %1474 = vmatprep.subr.mxu0 0.0
    %1475 = vmatpush1.msra.mxu0 %v1394
    %1476 = vmatprep.subr.mxu0 0.0
    %1477 = vmatpush1.msra.mxu0 %v1399
    %1478 = vmatprep.subr.mxu0 0.0
    %1479 = vmatpush1.msra.mxu0 %v1404
    %1480 = vmatprep.subr.mxu0 0.0
    %1481 = vmatpush1.msra.mxu0 %v1409
    %1482 = vmatprep.subr.mxu0 0.0
    %1483 = vmatpush1.msra.mxu0 %v1414
    %1484 = vmatprep.subr.mxu0 0.0
    %1485 = vmatpush1.msra.mxu0 %v1419
    %1486 = vmatprep.mubr.f32.mxu0 %v90
    %1487 = vmatmul.mubr.f32.gmra.mrb[0].mxu0 %v89
    %v1488 = vpop.f32.mrb[0].mxu0
    %v1489 = vadd.f32 0.0, %v1488
    %v1490 = vpop.f32.mrb[0].mxu0
    %1491 = vmatprep.mubr.f32.mxu0 %v92
    %1492 = vmatmul.mubr.f32.gmra.mrb[0].mxu0 %v91
    %v1493 = vpop.f32.mrb[0].mxu0
    %v1494 = vadd.f32 0.0, %v1493
    %v1495 = vpop.f32.mrb[0].mxu0
    %1496 = vmatprep.mubr.f32.mxu0 %v94
    %1497 = vmatmul.mubr.f32.gmra.mrb[0].mxu0 %v93
    %v1498 = vpop.f32.mrb[0].mxu0
    %v1499 = vadd.f32 0.0, %v1498
    %v1500 = vpop.f32.mrb[0].mxu0
    %1501 = vmatprep.mubr.f32.mxu0 %v96
    %1502 = vmatmul.mubr.f32.gmra.mrb[0].mxu0 %v95
    %v1503 = vpop.f32.mrb[0].mxu0
    %v1504 = vadd.f32 0.0, %v1503
    %v1505 = vpop.f32.mrb[0].mxu0
    %1506 = vmatprep.mubr.f32.mxu0 %v98
    %1507 = vmatmul.mubr.f32.gmra.mrb[0].mxu0 %v97
    %v1508 = vpop.f32.mrb[0].mxu0
    %v1509 = vadd.f32 0.0, %v1508
    %v1510 = vpop.f32.mrb[0].mxu0
    %1511 = vmatprep.mubr.f32.mxu0 %v100
    %1512 = vmatmul.mubr.f32.gmra.mrb[0].mxu0 %v99
    %v1513 = vpop.f32.mrb[0].mxu0
    %v1514 = vadd.f32 0.0, %v1513
    %v1515 = vpop.f32.mrb[0].mxu0
    %1516 = vmatprep.mubr.f32.mxu0 %v102
    %1517 = vmatmul.mubr.f32.gmra.mrb[0].mxu0 %v101
    %v1518 = vpop.f32.mrb[0].mxu0
    %v1519 = vadd.f32 0.0, %v1518
    %v1520 = vpop.f32.mrb[0].mxu0
    %1521 = vmatprep.mubr.f32.mxu0 %v104
    %1522 = vmatmul.mubr.f32.gmra.mrb[0].mxu0 %v103
    %v1523 = vpop.f32.mrb[0].mxu0
    %v1524 = vadd.f32 0.0, %v1523
    %v1525 = vpop.f32.mrb[0].mxu0
    %1526 = vmatprep.mubr.f32.mxu0 %v106
    %1527 = vmatmul.mubr.f32.gmra.mrb[0].mxu0 %v105
    %v1528 = vpop.f32.mrb[0].mxu0
    %v1529 = vadd.f32 0.0, %v1528
    %v1530 = vpop.f32.mrb[0].mxu0
    %1531 = vmatprep.mubr.f32.mxu0 %v108
    %1532 = vmatmul.mubr.f32.gmra.mrb[0].mxu0 %v107
    %v1533 = vpop.f32.mrb[0].mxu0
    %v1534 = vadd.f32 0.0, %v1533
    %v1535 = vpop.f32.mrb[0].mxu0
    %1536 = vmatprep.mubr.f32.mxu0 %v110
    %1537 = vmatmul.mubr.f32.gmra.mrb[0].mxu0 %v109
    %v1538 = vpop.f32.mrb[0].mxu0
    %v1539 = vadd.f32 0.0, %v1538
    %v1540 = vpop.f32.mrb[0].mxu0
    %1541 = vmatprep.mubr.f32.mxu0 %v112
    %1542 = vmatmul.mubr.f32.gmra.mrb[0].mxu0 %v111
    %v1543 = vpop.f32.mrb[0].mxu0
    %v1544 = vadd.f32 0.0, %v1543
    %v1545 = vpop.f32.mrb[0].mxu0
    %1546 = vmatprep.mubr.f32.mxu0 %v114
    %1547 = vmatmul.mubr.f32.gmra.mrb[0].mxu0 %v113
    %v1548 = vpop.f32.mrb[0].mxu0
    %v1549 = vadd.f32 0.0, %v1548
    %v1550 = vpop.f32.mrb[0].mxu0
    %1551 = vmatprep.mubr.f32.mxu0 %v116
    %1552 = vmatmul.mubr.f32.gmra.mrb[0].mxu0 %v115
    %v1553 = vpop.f32.mrb[0].mxu0
    %v1554 = vadd.f32 0.0, %v1553
    %v1555 = vpop.f32.mrb[0].mxu0
    %1556 = vmatprep.mubr.f32.mxu0 %v118
    %1557 = vmatmul.mubr.f32.gmra.mrb[0].mxu0 %v117
    %v1558 = vpop.f32.mrb[0].mxu0
    %v1559 = vadd.f32 0.0, %v1558
    %v1560 = vpop.f32.mrb[0].mxu0
    %1561 = vmatprep.mubr.f32.mxu0 %v120
    %1562 = vmatmul.mubr.f32.gmra.mrb[0].mxu0 %v119
    %v1563 = vpop.f32.mrb[0].mxu0
    %v1564 = vadd.f32 0.0, %v1563
    %v1565 = vpop.f32.mrb[0].mxu0
    %1566 = vmatprep.mubr.f32.mxu0 %v122
    %1567 = vmatmul.mubr.f32.gmra.mrb[0].mxu0 %v121
    %v1568 = vpop.f32.mrb[0].mxu0
    %v1569 = vadd.f32 0.0, %v1568
    %v1570 = vpop.f32.mrb[0].mxu0
    %1571 = vmatprep.mubr.f32.mxu0 %v124
    %1572 = vmatmul.mubr.f32.gmra.mrb[0].mxu0 %v123
    %v1573 = vpop.f32.mrb[0].mxu0
    %v1574 = vadd.f32 0.0, %v1573
    %v1575 = vpop.f32.mrb[0].mxu0
    %1576 = vmatprep.mubr.f32.mxu0 %v126
    %1577 = vmatmul.mubr.f32.gmra.mrb[0].mxu0 %v125
    %v1578 = vpop.f32.mrb[0].mxu0
    %v1579 = vadd.f32 0.0, %v1578
    %v1580 = vpop.f32.mrb[0].mxu0
    %1581 = vmatprep.mubr.f32.mxu0 %v128
    %1582 = vmatmul.mubr.f32.gmra.mrb[0].mxu0 %v127
    %v1583 = vpop.f32.mrb[0].mxu0
    %v1584 = vadd.f32 0.0, %v1583
    %v1585 = vpop.f32.mrb[0].mxu0
    %1586 = vmatprep.mubr.f32.mxu0 %v130
    %1587 = vmatmul.mubr.f32.gmra.mrb[0].mxu0 %v129
    %v1588 = vpop.f32.mrb[0].mxu0
    %v1589 = vadd.f32 0.0, %v1588
    %v1590 = vpop.f32.mrb[0].mxu0
    %1591 = vmatprep.mubr.f32.mxu0 %v132
    %1592 = vmatmul.mubr.f32.gmra.mrb[0].mxu0 %v131
    %v1593 = vpop.f32.mrb[0].mxu0
    %v1594 = vadd.f32 0.0, %v1593
    %v1595 = vpop.f32.mrb[0].mxu0
    %1596 = vmatprep.mubr.f32.mxu0 %v134
    %1597 = vmatmul.mubr.f32.gmra.mrb[0].mxu0 %v133
    %v1598 = vpop.f32.mrb[0].mxu0
    %v1599 = vadd.f32 0.0, %v1598
    %v1600 = vpop.f32.mrb[0].mxu0
    %1601 = vmatprep.mubr.f32.mxu0 %v136
    %1602 = vmatmul.mubr.f32.gmra.mrb[0].mxu0 %v135
    %v1603 = vpop.f32.mrb[0].mxu0
    %v1604 = vadd.f32 0.0, %v1603
    %v1605 = vpop.f32.mrb[0].mxu0
    %1606 = vmatprep.mubr.f32.mxu0 %v138
    %1607 = vmatmul.mubr.f32.gmra.mrb[0].mxu0 %v137
    %v1608 = vpop.f32.mrb[0].mxu0
    %v1609 = vadd.f32 0.0, %v1608
    %v1610 = vpop.f32.mrb[0].mxu0
    %1611 = vmatprep.mubr.f32.mxu0 %v140
    %1612 = vmatmul.mubr.f32.gmra.mrb[0].mxu0 %v139
    %v1613 = vpop.f32.mrb[0].mxu0
    %v1614 = vadd.f32 0.0, %v1613
    %v1615 = vpop.f32.mrb[0].mxu0
    %1616 = vmatprep.mubr.f32.mxu0 %v142
    %1617 = vmatmul.mubr.f32.gmra.mrb[0].mxu0 %v141
    %v1618 = vpop.f32.mrb[0].mxu0
    %v1619 = vadd.f32 0.0, %v1618
    %v1620 = vpop.f32.mrb[0].mxu0
    %1621 = vmatprep.mubr.f32.mxu0 %v144
    %1622 = vmatmul.mubr.f32.gmra.mrb[0].mxu0 %v143
    %v1623 = vpop.f32.mrb[0].mxu0
    %v1624 = vadd.f32 0.0, %v1623
    %v1625 = vpop.f32.mrb[0].mxu0
    %1626 = vmatprep.mubr.f32.mxu0 %v146
    %1627 = vmatmul.mubr.f32.gmra.mrb[0].mxu0 %v145
    %v1628 = vpop.f32.mrb[0].mxu0
    %v1629 = vadd.f32 0.0, %v1628
    %v1630 = vpop.f32.mrb[0].mxu0
    %1631 = vmatprep.mubr.f32.mxu0 %v148
    %1632 = vmatmul.mubr.f32.gmra.mrb[0].mxu0 %v147
    %v1633 = vpop.f32.mrb[0].mxu0
    %v1634 = vadd.f32 0.0, %v1633
    %v1635 = vpop.f32.mrb[0].mxu0
    %1636 = vmatprep.mubr.f32.mxu0 %v150
    %1637 = vmatmul.mubr.f32.gmra.mrb[0].mxu0 %v149
    %v1638 = vpop.f32.mrb[0].mxu0
    %v1639 = vadd.f32 0.0, %v1638
    %v1640 = vpop.f32.mrb[0].mxu0
    %1641 = vmatprep.mubr.f32.mxu0 %v152
    %1642 = vmatmul.mubr.f32.gmra.mrb[0].mxu0 %v151
    %v1643 = vpop.f32.mrb[0].mxu0
    %v1644 = vadd.f32 0.0, %v1643
    %v1645 = vpop.f32.mrb[0].mxu0
    %1646 = vdwg.mxu0
    %1647 = vst [vmem:[#allocation11] sm:$0xff] %v1489
    %1648 = vst [vmem:[#allocation11 + $0x8] sm:$0xff] %v1494
    %1649 = vst [vmem:[#allocation11 + $0x10] sm:$0xff] %v1499
    %1650 = vst [vmem:[#allocation11 + $0x18] sm:$0xff] %v1504
    %1651 = vst [vmem:[#allocation11 + $0x20] sm:$0xff] %v1509
    %1652 = vst [vmem:[#allocation11 + $0x28] sm:$0xff] %v1514
    %1653 = vst [vmem:[#allocation11 + $0x30] sm:$0xff] %v1519
    %1654 = vst [vmem:[#allocation11 + $0x38] sm:$0xff] %v1524
    %1655 = vst [vmem:[#allocation11 + $0x40] sm:$0xff] %v1529
    %1656 = vst [vmem:[#allocation11 + $0x48] sm:$0xff] %v1534
    %1657 = vst [vmem:[#allocation11 + $0x50] sm:$0xff] %v1539
    %1658 = vst [vmem:[#allocation11 + $0x58] sm:$0xff] %v1544
    %1659 = vst [vmem:[#allocation11 + $0x60] sm:$0xff] %v1549
    %1660 = vst [vmem:[#allocation11 + $0x68] sm:$0xff] %v1554
    %1661 = vst [vmem:[#allocation11 + $0x70] sm:$0xff] %v1559
    %1662 = vst [vmem:[#allocation11 + $0x78] sm:$0xff] %v1564
    %1663 = vst [vmem:[#allocation11 + $0x80] sm:$0xff] %v1569
    %1664 = vst [vmem:[#allocation11 + $0x88] sm:$0xff] %v1574
    %1665 = vst [vmem:[#allocation11 + $0x90] sm:$0xff] %v1579
    %1666 = vst [vmem:[#allocation11 + $0x98] sm:$0xff] %v1584
    %1667 = vst [vmem:[#allocation11 + $0xa0] sm:$0xff] %v1589
    %1668 = vst [vmem:[#allocation11 + $0xa8] sm:$0xff] %v1594
    %1669 = vst [vmem:[#allocation11 + $0xb0] sm:$0xff] %v1599
    %1670 = vst [vmem:[#allocation11 + $0xb8] sm:$0xff] %v1604
    %1671 = vst [vmem:[#allocation11 + $0xc0] sm:$0xff] %v1609
    %1672 = vst [vmem:[#allocation11 + $0xc8] sm:$0xff] %v1614
    %1673 = vst [vmem:[#allocation11 + $0xd0] sm:$0xff] %v1619
    %1674 = vst [vmem:[#allocation11 + $0xd8] sm:$0xff] %v1624
    %1675 = vst [vmem:[#allocation11 + $0xe0] sm:$0xff] %v1629
    %1676 = vst [vmem:[#allocation11 + $0xe8] sm:$0xff] %v1634
    %1677 = vst [vmem:[#allocation11 + $0xf0] sm:$0xff] %v1639
    %1678 = vst [vmem:[#allocation11 + $0xf8] sm:$0xff] %v1644
    // Predicated region
    $region42: #{tpu_custom_call.1} parent=1 // pred_check
      _
    $region43: #{tpu_custom_call.1} parent=1 // pred_check_branch
      %1680 = sbr.rel (0) target = $region45
    $region44: #{tpu_custom_call.1} parent=1 // pred_region
      %s1682 = ssub.s32 4096, 4096
      %1683 = vsyncadd [#allocation4], %s1682
      %s1684 = sshll.u32 [#allocation11], 4
      %s1685 = int_to_ptr.vmem [resolvable:$true] %s1684
      %1690 = dma.vmem_to_hbm [thread:$0]  %s1685, 4096, %s5, [#allocation4], 128, 128, 8
    $region45: #{tpu_custom_call.1} parent=1 // pred_fallthru
      _
    // Predicated region
    $region46: #{tpu_custom_call.1} parent=1 // pred_check
      _
    $region47: #{tpu_custom_call.1} parent=1 // pred_check_branch
      %1692 = sbr.rel (0) target = $region49
    $region48: #{tpu_custom_call.1} parent=1 // pred_region
      %1693 = dma.done [#allocation4], 4096
    $region49: #{tpu_custom_call.1} parent=1 // pred_fallthru
      _
    %1694 = vsyncpa [#allocation3], 1
    %1695 = vsyncpa [#allocation6], 1
    %1696 = vsyncpa [#allocation9], 1
    %1697 = vsyncpa [#allocation4], 1

</llo_original>
